<compile_context>
chip_gen: v7x
topology: tpu7x:2x2x1
jax: 0.10.0
libtpu: 0.0.40
codegen_flags: <defaults>
</compile_context>

<pallas_src>
import functools
import math

import jax
import jax.numpy as jnp
from jax.experimental import pallas as pl
from jax.experimental.pallas import tpu as pltpu


def _round_up(a: int, m: int) -> int:
    return (a + m - 1) // m * m


def attn_block_kernel(x_ref, y_ref,
                      w1m_ref, b1m_ref, w2m_ref, b2m_ref,
                      w1p_ref, b1p_ref, w2p_ref, b2p_ref,
                      wl_ref, bl_ref,
                      out_ref, *, seq_len, approx_recip):
    TB, D = x_ref.shape
    L = seq_len
    cdt = w1m_ref.dtype          # MXU operand dtype (f32 or bf16)
    f32 = jnp.float32

    x = x_ref[...]               # (TB, D)      compute dtype
    y = y_ref[...]               # (TB*L, D)    compute dtype (batch*seq flattened)

    # fc_met: Linear -> ReLU -> (Dropout == identity at eval) -> Linear, f32 accumulation.
    hm = jnp.maximum(
        jnp.dot(x, w1m_ref[...], preferred_element_type=f32) + b1m_ref[...], 0.0)       # (TB, H)
    xm = jnp.dot(hm.astype(cdt), w2m_ref[...], preferred_element_type=f32) + b2m_ref[...]  # (TB, D)

    # fc_prot on the flattened slab: one tall matmul instead of L skinny ones.
    hp = jnp.maximum(
        jnp.dot(y, w1p_ref[...], preferred_element_type=f32) + b1p_ref[...], 0.0)       # (TB*L, H)
    yp = jnp.dot(hp.astype(cdt), w2p_ref[...], preferred_element_type=f32) + b2p_ref[...]  # (TB*L, D)
    yp3 = yp.reshape(TB, L, D)                                                           # (TB, L, D)

    # scores[b, l] = <yp3[b, l, :], xm[b, :]> / sqrt(D)
    # VPU multiply + XLU lane reduce (a width-1 MXU matmul would waste a full pass).
    scores = jnp.sum(yp3 * xm[:, None, :], axis=-1) * (1.0 / math.sqrt(D))               # (TB, L)

    # softmax over L (f32, max-subtracted)
    mx = jnp.max(scores, axis=-1, keepdims=True)
    p = jnp.exp(scores - mx)
    denom = jnp.sum(p, axis=-1, keepdims=True)
    if approx_recip:
        z = p * pl.reciprocal(denom, approx=True)    # EUP slot -> effectively free
    else:
        z = p / denom                                 # exact division on the strict f32 path

    # attended[b, :] = sum_l z[b, l] * yp3[b, l, :]  — VPU multiply + sublane reduce.
    attn = jnp.sum(z[:, :, None] * yp3, axis=1)       # (TB, D) f32

    out = jnp.dot(attn.astype(cdt), wl_ref[...], preferred_element_type=f32) + bl_ref[...]  # (TB, O_pad)
    out_ref[...] = out.astype(out_ref.dtype)


def attn_block_forward(x, y, params, *, block_b=256, compute_dtype=jnp.float32):
    B, D = x.shape
    By, L, Dy = y.shape
    assert By == B and Dy == D
    H = params["w1m"].shape[1]
    O = params["wl"].shape[1]

    cdt = jnp.dtype(compute_dtype)
    f32 = jnp.float32

    # --- batch tile: sublane-aligned; aim for >=2 grid steps (both v7x TensorCores). ---
    block_b = max(8, _round_up(block_b, 8))
    if B <= 8:
        TB = _round_up(max(B, 1), 8)
    else:
        TB = max(8, min(block_b, _round_up((B + 1) // 2, 8)))
    B_pad = _round_up(B, TB)
    grid = (B_pad // TB,)

    # Lane-dense output: pad O up to a multiple of 128 so stores are unmasked.
    O_pad = _round_up(O, 128)

    # --- pad / cast inputs; flatten y to (B_pad*L, D) for the tall fc_prot matmul ---
    x_p = jnp.zeros((B_pad, D), cdt).at[:B].set(x.astype(cdt))
    y_p = jnp.zeros((B_pad, L, D), cdt).at[:B].set(y.astype(cdt)).reshape(B_pad * L, D)

    w = {k: params[k].astype(cdt) for k in ("w1m", "w2m", "w1p", "w2p")}
    b = {k: params[k].astype(f32) for k in ("b1m", "b2m", "b1p", "b2p")}
    wl_p = jnp.zeros((D, O_pad), cdt).at[:, :O].set(params["wl"].astype(cdt))
    bl_p = jnp.zeros((1, O_pad), f32).at[:, :O].set(params["bl"].astype(f32))

    def rep(shape):
        # Resident weight block: constant index map -> same VMEM block every grid step
        # (no per-step re-DMA of weights; ~tens of KB total at these sizes).
        return pl.BlockSpec(shape, lambda bidx, _n=len(shape): (0,) * _n)

    grid_spec = pltpu.PrefetchScalarGridSpec(
        num_scalar_prefetch=0,
        grid=grid,
        in_specs=[
            pl.BlockSpec((TB, D), lambda bidx: (bidx, 0)),        # x       (TB, D)
            pl.BlockSpec((TB * L, D), lambda bidx: (bidx, 0)),    # y flat  (TB*L, D)
            rep((D, H)), rep((1, H)), rep((H, D)), rep((1, D)),   # fc_met
            rep((D, H)), rep((1, H)), rep((H, D)), rep((1, D)),   # fc_prot
            rep((D, O_pad)), rep((1, O_pad)),                     # lin (lane-padded)
        ],
        out_specs=pl.BlockSpec((TB, O_pad), lambda bidx: (bidx, 0)),
    )

    kernel = functools.partial(attn_block_kernel, seq_len=L,
                               approx_recip=(cdt == jnp.bfloat16))

    out = pl.pallas_call(
        kernel,
        out_shape=jax.ShapeDtypeStruct((B_pad, O_pad), f32),
        grid_spec=grid_spec,
        compiler_params=pltpu.CompilerParams(
            dimension_semantics=("parallel",)),
    )(x_p, y_p,
      w["w1m"], b["b1m"], w["w2m"], b["b2m"],
      w["w1p"], b["b1p"], w["w2p"], b["b2p"],
      wl_p, bl_p)

    return out[:B, :O]


def ref_forward(x, y, params, compute_dtype=jnp.float32):
    """Pure-JAX reference mirroring the PyTorch AttnBlock forward (eval mode),
    with matmul operands cast to `compute_dtype` and f32 accumulation."""
    cdt = jnp.dtype(compute_dtype)
    f32 = jnp.float32

    def lin(a, w_, b_):
        return jnp.dot(a.astype(cdt), w_.astype(cdt), preferred_element_type=f32) + b_.astype(f32)

    B, L, D = y.shape
    hm = jax.nn.relu(lin(x, params["w1m"], params["b1m"]))
    xm = lin(hm, params["w2m"], params["b2m"])                         # (B, D)
    y2 = y.reshape(B * L, D)
    hp = jax.nn.relu(lin(y2, params["w1p"], params["b1p"]))
    yp = lin(hp, params["w2p"], params["b2p"]).reshape(B, L, D)        # (B, L, D)
    scores = jnp.einsum("bld,bd->bl", yp, xm) / math.sqrt(D)
    z = jax.nn.softmax(scores, axis=1)                                 # (B, L)
    attn = jnp.einsum("bl,bld->bd", z, yp)                             # (B, D)
    return lin(attn, params["wl"], params["bl"])


def init_params(key, input_dim, hidden_dim, output_dim):
    """Deterministic init mimicking PyTorch Linear default (uniform +-1/sqrt(fan_in)).
    Weights stored transposed: (in_features, out_features); biases (1, out)."""
    ks = jax.random.split(key, 10)

    def lin(kw, kb, fan_in, fan_out):
        bound = 1.0 / math.sqrt(fan_in)
        w_ = jax.random.uniform(kw, (fan_in, fan_out), jnp.float32, -bound, bound)
        b_ = jax.random.uniform(kb, (1, fan_out), jnp.float32, -bound, bound)
        return w_, b_

    w1m, b1m = lin(ks[0], ks[1], input_dim, hidden_dim)
    w2m, b2m = lin(ks[2], ks[3], hidden_dim, input_dim)
    w1p, b1p = lin(ks[4], ks[5], input_dim, hidden_dim)
    w2p, b2p = lin(ks[6], ks[7], hidden_dim, input_dim)
    wl, bl = lin(ks[8], ks[9], input_dim, output_dim)
    return dict(w1m=w1m, b1m=b1m, w2m=w2m, b2m=b2m,
                w1p=w1p, b1p=b1p, w2p=w2p, b2p=b2p,
                wl=wl, bl=bl)


if __name__ == "__main__":
    B, L = 16, 8                     # batch, protein sequence length (small, 2 grid steps)
    INPUT_DIM, HIDDEN_DIM, OUTPUT_DIM = 32, 32, 16

    key = jax.random.PRNGKey(0)
    k_x, k_y, k_p = jax.random.split(key, 3)
    x = jax.random.normal(k_x, (B, INPUT_DIM), jnp.float32)       # metabolite features
    y = jax.random.normal(k_y, (B, L, INPUT_DIM), jnp.float32)    # protein sequence features
    params = init_params(k_p, INPUT_DIM, HIDDEN_DIM, OUTPUT_DIM)

    # Strict f32 path (exact softmax division).
    out_f32 = jax.block_until_ready(attn_block_forward(x, y, params, compute_dtype=jnp.float32))
    ref_f32 = jax.block_until_ready(ref_forward(x, y, params, compute_dtype=jnp.float32))
    assert out_f32.shape == (B, OUTPUT_DIM)
    assert jnp.allclose(out_f32, ref_f32, atol=1e-4, rtol=1e-4), "f32 mismatch vs JAX reference"

    # bf16 MXU path (bf16 operands, f32 accumulation, approx-reciprocal softmax).
    out_bf16 = jax.block_until_ready(attn_block_forward(x, y, params, compute_dtype=jnp.bfloat16))
    ref_bf16 = jax.block_until_ready(ref_forward(x, y, params, compute_dtype=jnp.bfloat16))
    assert out_bf16.shape == (B, OUTPUT_DIM)
    assert jnp.allclose(out_bf16, ref_bf16, atol=2e-2, rtol=2e-2), "bf16 mismatch vs JAX reference"

    print("KERNEL_OK")
</pallas_src>

<mosaic_0001>
module attributes {stable_mosaic.version = 11 : i64} {
  func.func @attn_block_kernel(%arg0: i32, %arg1: memref<8x32xf32, #tpu.memory_space<vmem>>, %arg2: memref<64x32xf32, #tpu.memory_space<vmem>>, %arg3: memref<32x32xf32, #tpu.memory_space<vmem>>, %arg4: memref<1x32xf32, #tpu.memory_space<vmem>>, %arg5: memref<32x32xf32, #tpu.memory_space<vmem>>, %arg6: memref<1x32xf32, #tpu.memory_space<vmem>>, %arg7: memref<32x32xf32, #tpu.memory_space<vmem>>, %arg8: memref<1x32xf32, #tpu.memory_space<vmem>>, %arg9: memref<32x32xf32, #tpu.memory_space<vmem>>, %arg10: memref<1x32xf32, #tpu.memory_space<vmem>>, %arg11: memref<32x128xf32, #tpu.memory_space<vmem>>, %arg12: memref<1x128xf32, #tpu.memory_space<vmem>>, %arg13: memref<8x128xf32, #tpu.memory_space<vmem>>) attributes {dimension_semantics = [#tpu.dimension_semantics<parallel>], iteration_bounds = array<i64: 2>, scalar_prefetch = 0 : i64, scratch_operands = 0 : i64, tpu.core_type = #tpu.core_type<tc>, window_params = [{transform_indices = @transform_0, window_bounds = array<i64: 8, 32>}, {transform_indices = @transform_1, window_bounds = array<i64: 64, 32>}, {pipeline_mode = #tpu.pipeline_mode<synchronous>, transform_indices = @transform_2, window_bounds = array<i64: 32, 32>}, {pipeline_mode = #tpu.pipeline_mode<synchronous>, transform_indices = @transform_3, window_bounds = array<i64: 1, 32>}, {pipeline_mode = #tpu.pipeline_mode<synchronous>, transform_indices = @transform_4, window_bounds = array<i64: 32, 32>}, {pipeline_mode = #tpu.pipeline_mode<synchronous>, transform_indices = @transform_5, window_bounds = array<i64: 1, 32>}, {pipeline_mode = #tpu.pipeline_mode<synchronous>, transform_indices = @transform_6, window_bounds = array<i64: 32, 32>}, {pipeline_mode = #tpu.pipeline_mode<synchronous>, transform_indices = @transform_7, window_bounds = array<i64: 1, 32>}, {pipeline_mode = #tpu.pipeline_mode<synchronous>, transform_indices = @transform_8, window_bounds = array<i64: 32, 32>}, {pipeline_mode = #tpu.pipeline_mode<synchronous>, transform_indices = @transform_9, window_bounds = array<i64: 1, 32>}, {pipeline_mode = #tpu.pipeline_mode<synchronous>, transform_indices = @transform_10, window_bounds = array<i64: 32, 128>}, {pipeline_mode = #tpu.pipeline_mode<synchronous>, transform_indices = @transform_11, window_bounds = array<i64: 1, 128>}, {transform_indices = @transform_12, window_bounds = array<i64: 8, 128>}]} {
    %c0 = arith.constant 0 : index
    %c0_0 = arith.constant 0 : index
    %0 = vector.load %arg1[%c0, %c0_0] : memref<8x32xf32, #tpu.memory_space<vmem>>, vector<8x32xf32>
    %c0_1 = arith.constant 0 : index
    %c0_2 = arith.constant 0 : index
    %1 = vector.load %arg2[%c0_1, %c0_2] : memref<64x32xf32, #tpu.memory_space<vmem>>, vector<64x32xf32>
    %c0_3 = arith.constant 0 : index
    %c0_4 = arith.constant 0 : index
    %2 = vector.load %arg3[%c0_3, %c0_4] : memref<32x32xf32, #tpu.memory_space<vmem>>, vector<32x32xf32>
    %cst = arith.constant dense<0.000000e+00> : vector<8x32xf32>
    %3 = tpu.matmul %0, %2, %cst {dimension_numbers = #tpu.dot_dimension_numbers<[1], [0], [0], [1], [0, 0, 1, 1], [], []>} : vector<8x32xf32>, vector<32x32xf32>, vector<8x32xf32> -> vector<8x32xf32>
    %c0_5 = arith.constant 0 : index
    %c0_6 = arith.constant 0 : index
    %4 = vector.load %arg4[%c0_5, %c0_6] : memref<1x32xf32, #tpu.memory_space<vmem>>, vector<1x32xf32>
    %5 = vector.broadcast %4 : vector<1x32xf32> to vector<8x32xf32>
    %6 = arith.addf %3, %5 : vector<8x32xf32>
    %cst_7 = arith.constant 0.000000e+00 : f32
    %7 = vector.broadcast %cst_7 : f32 to vector<8x32xf32>
    %8 = arith.maximumf %6, %7 : vector<8x32xf32>
    %c0_8 = arith.constant 0 : index
    %c0_9 = arith.constant 0 : index
    %9 = vector.load %arg5[%c0_8, %c0_9] : memref<32x32xf32, #tpu.memory_space<vmem>>, vector<32x32xf32>
    %cst_10 = arith.constant dense<0.000000e+00> : vector<8x32xf32>
    %10 = tpu.matmul %8, %9, %cst_10 {dimension_numbers = #tpu.dot_dimension_numbers<[1], [0], [0], [1], [0, 0, 1, 1], [], []>} : vector<8x32xf32>, vector<32x32xf32>, vector<8x32xf32> -> vector<8x32xf32>
    %c0_11 = arith.constant 0 : index
    %c0_12 = arith.constant 0 : index
    %11 = vector.load %arg6[%c0_11, %c0_12] : memref<1x32xf32, #tpu.memory_space<vmem>>, vector<1x32xf32>
    %12 = vector.broadcast %11 : vector<1x32xf32> to vector<8x32xf32>
    %13 = arith.addf %10, %12 : vector<8x32xf32>
    %c0_13 = arith.constant 0 : index
    %c0_14 = arith.constant 0 : index
    %14 = vector.load %arg7[%c0_13, %c0_14] : memref<32x32xf32, #tpu.memory_space<vmem>>, vector<32x32xf32>
    %cst_15 = arith.constant dense<0.000000e+00> : vector<64x32xf32>
    %15 = tpu.matmul %1, %14, %cst_15 {dimension_numbers = #tpu.dot_dimension_numbers<[1], [0], [0], [1], [0, 0, 1, 1], [], []>} : vector<64x32xf32>, vector<32x32xf32>, vector<64x32xf32> -> vector<64x32xf32>
    %c0_16 = arith.constant 0 : index
    %c0_17 = arith.constant 0 : index
    %16 = vector.load %arg8[%c0_16, %c0_17] : memref<1x32xf32, #tpu.memory_space<vmem>>, vector<1x32xf32>
    %17 = vector.broadcast %16 : vector<1x32xf32> to vector<64x32xf32>
    %18 = arith.addf %15, %17 : vector<64x32xf32>
    %cst_18 = arith.constant 0.000000e+00 : f32
    %19 = vector.broadcast %cst_18 : f32 to vector<64x32xf32>
    %20 = arith.maximumf %18, %19 : vector<64x32xf32>
    %c0_19 = arith.constant 0 : index
    %c0_20 = arith.constant 0 : index
    %21 = vector.load %arg9[%c0_19, %c0_20] : memref<32x32xf32, #tpu.memory_space<vmem>>, vector<32x32xf32>
    %cst_21 = arith.constant dense<0.000000e+00> : vector<64x32xf32>
    %22 = tpu.matmul %20, %21, %cst_21 {dimension_numbers = #tpu.dot_dimension_numbers<[1], [0], [0], [1], [0, 0, 1, 1], [], []>} : vector<64x32xf32>, vector<32x32xf32>, vector<64x32xf32> -> vector<64x32xf32>
    %c0_22 = arith.constant 0 : index
    %c0_23 = arith.constant 0 : index
    %23 = vector.load %arg10[%c0_22, %c0_23] : memref<1x32xf32, #tpu.memory_space<vmem>>, vector<1x32xf32>
    %24 = vector.broadcast %23 : vector<1x32xf32> to vector<64x32xf32>
    %25 = arith.addf %22, %24 : vector<64x32xf32>
    %26 = vector.shape_cast %25 : vector<64x32xf32> to vector<8x8x32xf32>
    %27 = vector.shape_cast %13 : vector<8x32xf32> to vector<8x1x32xf32>
    %28 = vector.broadcast %27 : vector<8x1x32xf32> to vector<8x8x32xf32>
    %29 = arith.mulf %26, %28 : vector<8x8x32xf32>
    %cst_24 = arith.constant dense<0.000000e+00> : vector<8x8xf32>
    %30 = vector.multi_reduction <add>, %29, %cst_24 [2] : vector<8x8x32xf32> to vector<8x8xf32>
    %cst_25 = arith.constant 0.176776692 : f32
    %31 = vector.broadcast %cst_25 : f32 to vector<8x8xf32>
    %32 = arith.mulf %30, %31 : vector<8x8xf32>
    %cst_26 = arith.constant dense<0xFF800000> : vector<8xf32>
    %33 = vector.multi_reduction <maximumf>, %32, %cst_26 [1] : vector<8x8xf32> to vector<8xf32>
    %34 = vector.shape_cast %33 : vector<8xf32> to vector<8x1xf32>
    %35 = vector.broadcast %34 : vector<8x1xf32> to vector<8x8xf32>
    %36 = arith.subf %32, %35 : vector<8x8xf32>
    %37 = math.exp %36 : vector<8x8xf32>
    %cst_27 = arith.constant dense<0.000000e+00> : vector<8xf32>
    %38 = vector.multi_reduction <add>, %37, %cst_27 [1] : vector<8x8xf32> to vector<8xf32>
    %39 = vector.shape_cast %38 : vector<8xf32> to vector<8x1xf32>
    %40 = vector.broadcast %39 : vector<8x1xf32> to vector<8x8xf32>
    %41 = arith.divf %37, %40 : vector<8x8xf32>
    %42 = vector.shape_cast %41 : vector<8x8xf32> to vector<8x8x1xf32>
    %43 = vector.broadcast %42 : vector<8x8x1xf32> to vector<8x8x32xf32>
    %44 = arith.mulf %43, %26 : vector<8x8x32xf32>
    %cst_28 = arith.constant dense<0.000000e+00> : vector<8x32xf32>
    %45 = vector.multi_reduction <add>, %44, %cst_28 [1] : vector<8x8x32xf32> to vector<8x32xf32>
    %c0_29 = arith.constant 0 : index
    %c0_30 = arith.constant 0 : index
    %46 = vector.load %arg11[%c0_29, %c0_30] : memref<32x128xf32, #tpu.memory_space<vmem>>, vector<32x128xf32>
    %cst_31 = arith.constant dense<0.000000e+00> : vector<8x128xf32>
    %47 = tpu.matmul %45, %46, %cst_31 {dimension_numbers = #tpu.dot_dimension_numbers<[1], [0], [0], [1], [0, 0, 1, 1], [], []>} : vector<8x32xf32>, vector<32x128xf32>, vector<8x128xf32> -> vector<8x128xf32>
    %c0_32 = arith.constant 0 : index
    %c0_33 = arith.constant 0 : index
    %48 = vector.load %arg12[%c0_32, %c0_33] : memref<1x128xf32, #tpu.memory_space<vmem>>, vector<1x128xf32>
    %49 = vector.broadcast %48 : vector<1x128xf32> to vector<8x128xf32>
    %50 = arith.addf %47, %49 : vector<8x128xf32>
    %c0_34 = arith.constant 0 : index
    %c0_35 = arith.constant 0 : index
    %51 = vector.load %arg13[%c0_34, %c0_35] : memref<8x128xf32, #tpu.memory_space<vmem>>, vector<8x128xf32>
    tpu.vector_store %arg13[%c0_34, %c0_35], %50 {strides = array<i32>} : memref<8x128xf32, #tpu.memory_space<vmem>>, vector<8x128xf32>,
    return
  }
  func.func @transform_0(%arg0: i32) -> (i32, i32) {
    %c0_i32 = arith.constant 0 : i32
    %c0_i32_0 = arith.constant 0 : i32
    return %arg0, %c0_i32 : i32, i32
  }
  func.func @transform_1(%arg0: i32) -> (i32, i32) {
    %c0_i32 = arith.constant 0 : i32
    %c0_i32_0 = arith.constant 0 : i32
    return %arg0, %c0_i32 : i32, i32
  }
  func.func @transform_2(%arg0: i32) -> (i32, i32) {
    %c0_i32 = arith.constant 0 : i32
    %c0_i32_0 = arith.constant 0 : i32
    %c0_i32_1 = arith.constant 0 : i32
    return %c0_i32, %c0_i32_0 : i32, i32
  }
  func.func @transform_3(%arg0: i32) -> (i32, i32) {
    %c0_i32 = arith.constant 0 : i32
    %c0_i32_0 = arith.constant 0 : i32
    %c0_i32_1 = arith.constant 0 : i32
    return %c0_i32, %c0_i32_0 : i32, i32
  }
  func.func @transform_4(%arg0: i32) -> (i32, i32) {
    %c0_i32 = arith.constant 0 : i32
    %c0_i32_0 = arith.constant 0 : i32
    %c0_i32_1 = arith.constant 0 : i32
    return %c0_i32, %c0_i32_0 : i32, i32
  }
  func.func @transform_5(%arg0: i32) -> (i32, i32) {
    %c0_i32 = arith.constant 0 : i32
    %c0_i32_0 = arith.constant 0 : i32
    %c0_i32_1 = arith.constant 0 : i32
    return %c0_i32, %c0_i32_0 : i32, i32
  }
  func.func @transform_6(%arg0: i32) -> (i32, i32) {
    %c0_i32 = arith.constant 0 : i32
    %c0_i32_0 = arith.constant 0 : i32
    %c0_i32_1 = arith.constant 0 : i32
    return %c0_i32, %c0_i32_0 : i32, i32
  }
  func.func @transform_7(%arg0: i32) -> (i32, i32) {
    %c0_i32 = arith.constant 0 : i32
    %c0_i32_0 = arith.constant 0 : i32
    %c0_i32_1 = arith.constant 0 : i32
    return %c0_i32, %c0_i32_0 : i32, i32
  }
  func.func @transform_8(%arg0: i32) -> (i32, i32) {
    %c0_i32 = arith.constant 0 : i32
    %c0_i32_0 = arith.constant 0 : i32
    %c0_i32_1 = arith.constant 0 : i32
    return %c0_i32, %c0_i32_0 : i32, i32
  }
  func.func @transform_9(%arg0: i32) -> (i32, i32) {
    %c0_i32 = arith.constant 0 : i32
    %c0_i32_0 = arith.constant 0 : i32
    %c0_i32_1 = arith.constant 0 : i32
    return %c0_i32, %c0_i32_0 : i32, i32
  }
  func.func @transform_10(%arg0: i32) -> (i32, i32) {
    %c0_i32 = arith.constant 0 : i32
    %c0_i32_0 = arith.constant 0 : i32
    %c0_i32_1 = arith.constant 0 : i32
    return %c0_i32, %c0_i32_0 : i32, i32
  }
  func.func @transform_11(%arg0: i32) -> (i32, i32) {
    %c0_i32 = arith.constant 0 : i32
    %c0_i32_0 = arith.constant 0 : i32
    %c0_i32_1 = arith.constant 0 : i32
    return %c0_i32, %c0_i32_0 : i32, i32
  }
  func.func @transform_12(%arg0: i32) -> (i32, i32) {
    %c0_i32 = arith.constant 0 : i32
    %c0_i32_0 = arith.constant 0 : i32
    return %arg0, %c0_i32 : i32, i32
  }
}

</mosaic_0001>

<llo_original>
// kernel: tpu_custom_call.1
$region0: #{tpu_custom_call.1}
  #allocation0 [shape = 'u32[]', space=smem, size = 0x4, offset = 0x4, fixed_abs, tag = 'smem constant byte address 0x4 - core index']
  #allocation1 [shape = 'u32[144,128]{1,0:T(1,128)}', space=vmem, size = 0x12000, scoped, tag = 'internal scratch']
  %s0 = inlined_call_operand.hbm [shape: f32[16,32], index: 0, kind: input, shape index: {}]
  %s1 = inlined_call_operand.vmem [shape: f32[128,32], index: 1, kind: input, shape index: {}]
  %s2 = inlined_call_operand.vmem [shape: f32[32,32], index: 2, kind: input, shape index: {}]
  %s3 = inlined_call_operand.vmem [shape: f32[1,32], index: 3, kind: input, shape index: {}]
  %s4 = inlined_call_operand.vmem [shape: f32[32,32], index: 4, kind: input, shape index: {}]
  %s5 = inlined_call_operand.vmem [shape: f32[1,32], index: 5, kind: input, shape index: {}]
  %s6 = inlined_call_operand.vmem [shape: f32[32,32], index: 6, kind: input, shape index: {}]
  %s7 = inlined_call_operand.vmem [shape: f32[1,32], index: 7, kind: input, shape index: {}]
  %s8 = inlined_call_operand.vmem [shape: f32[32,32], index: 8, kind: input, shape index: {}]
  %s9 = inlined_call_operand.vmem [shape: f32[1,32], index: 9, kind: input, shape index: {}]
  %s10 = inlined_call_operand.vmem [shape: f32[32,128], index: 10, kind: input, shape index: {}]
  %s11 = inlined_call_operand.vmem [shape: f32[1,128], index: 11, kind: input, shape index: {}]
  %s12 = inlined_call_operand.hbm [shape: f32[16,128], index: 12, kind: output, shape index: {}]
  %s13 = sld [smem:[#allocation0]]
  $region85: #{tpu_custom_call.1} parent=0
    _
  %s15 = ssub.s32 1, %s13
  %s16 = scalar_select 0, %s15, %s13
  $region1: #{tpu_custom_call.1} parent=0
    #allocation2 [shape = 'u8[8192]{0}', space=vmem, size = 0x2000, scoped, tag = 'input window, operand 0']
    #allocation3 [shape = 's32[2]{0}', space=sflag, size = 0x8, scoped, tag = 'scoped memory for tpu_custom_call.1']
    #allocation4 [shape = 's32[2]{0}', space=sflag, size = 0x8, scoped, tag = 'scoped memory for tpu_custom_call.1']
    #allocation5 [shape = 'u8[8192]{0}', space=vmem, size = 0x2000, scoped, tag = 'output window, operand 0']
    %17 = vsyncpa [#allocation3], 0
    %s18 = scalar_lea.sflag [#allocation3], 1
    %19 = vsyncpa %s18, 0
    %20 = vsyncpa [#allocation4], 0
    %s21 = scalar_lea.sflag [#allocation4], 1
    %22 = vsyncpa %s21, 0
    loop: start=0, step=1, limit=4
    $region2: #{tpu_custom_call.1} parent=1 // loop_pre_header
      _
    $region3: #{tpu_custom_call.1} parent=1 // loop_header
      %s24 = sphi 0, %s28
      %p25 = scmp.ge.s32.totalorder %s24, 4
      %s34 = sphi 0, %s36
      %s37 = sphi 0, %s34
      %s38 = sphi 0, %s37
      %s54 = sphi 0, %s38
      %s60 = sphi 0, %s62
      %s63 = sphi 0, %s60
      %s64 = sphi 0, %s63
      %s80 = sphi 0, %s64
      %s84 = sphi 0, %s84
      %s86 = sphi 0, %s84
      %s87 = sphi 0, %s86
      %s101 = sphi 0, %s87
      %s105 = sphi 0, %s105
      %s107 = sphi 0, %s105
      %s108 = sphi 0, %s107
      %s122 = sphi 0, %s108
      %s126 = sphi 0, %s126
      %s128 = sphi 0, %s126
      %s129 = sphi 0, %s128
      %s143 = sphi 0, %s129
      %s147 = sphi 0, %s147
      %s149 = sphi 0, %s147
      %s150 = sphi 0, %s149
      %s164 = sphi 0, %s150
      %s168 = sphi 0, %s168
      %s170 = sphi 0, %s168
      %s171 = sphi 0, %s170
      %s185 = sphi 0, %s171
      %s189 = sphi 0, %s189
      %s191 = sphi 0, %s189
      %s192 = sphi 0, %s191
      %s206 = sphi 0, %s192
      %s210 = sphi 0, %s210
      %s212 = sphi 0, %s210
      %s213 = sphi 0, %s212
      %s227 = sphi 0, %s213
      %s231 = sphi 0, %s231
      %s233 = sphi 0, %s231
      %s234 = sphi 0, %s233
      %s248 = sphi 0, %s234
      %s252 = sphi 0, %s252
      %s254 = sphi 0, %s252
      %s255 = sphi 0, %s254
      %s269 = sphi 0, %s255
      %s273 = sphi 0, %s273
      %s275 = sphi 0, %s273
      %s276 = sphi 0, %s275
      %s290 = sphi 0, %s276
      %s296 = sphi 0, %s298
      %s299 = sphi 0, %s296
      %s300 = sphi 0, %s299
      %s316 = sphi 0, %s300
    $region4: #{tpu_custom_call.1} parent=1 // loop_header_branch
      %27 = sbr.rel (%p25) target = $region8
    $region5: #{tpu_custom_call.1} parent=1 // loop_body
      %s29 = ssub.s32 %s24, 1
      %s30 = ssub.s32 %s24, 2
      %s31 = sadd.s32 %s24, 1
      %s32 = ssub.s32 %s24, %s31
      %p33 = scmp.eq.s32.totalorder %s32, 0
      %s35 = sadd.s32 %s34, 1
      %s36 = scalar_select %p33, %s34, %s35
      %p39 = pneg %p33
      %p40 = scmp.eq.s32.totalorder %s24, 1
      %p41 = por %p39, %p40
      %p42 = scmp.ne.s32.totalorder %s34, %s37
      %p43 = scmp.eq.s32.totalorder %s24, 0
      %p44 = por %p42, %p43
      %p45 = scmp.ne.s32.totalorder %s34, %s37
      %p46 = scmp.eq.s32.totalorder %s29, 1
      %p47 = por %p45, %p46
      %p48 = scmp.ne.s32.totalorder %s37, %s38
      %p49 = scmp.eq.s32.totalorder %s29, 0
      %p50 = por %p48, %p49
      %p51 = scmp.ne.s32.totalorder %s37, %s38
      %p52 = scmp.eq.s32.totalorder %s30, 1
      %p53 = por %p51, %p52
      %p55 = scmp.ne.s32.totalorder %s38, %s54
      %p56 = scmp.eq.s32.totalorder %s30, 0
      %p57 = por %p55, %p56
      %s58 = ssub.s32 %s24, %s31
      %p59 = scmp.eq.s32.totalorder %s58, 0
      %s61 = sadd.s32 %s60, 1
      %s62 = scalar_select %p59, %s60, %s61
      %p65 = pneg %p59
      %p66 = scmp.eq.s32.totalorder %s24, 1
      %p67 = por %p65, %p66
      %p68 = scmp.ne.s32.totalorder %s60, %s63
      %p69 = scmp.eq.s32.totalorder %s24, 0
      %p70 = por %p68, %p69
      %p71 = scmp.ne.s32.totalorder %s60, %s63
      %p72 = scmp.eq.s32.totalorder %s29, 1
      %p73 = por %p71, %p72
      %p74 = scmp.ne.s32.totalorder %s63, %s64
      %p75 = scmp.eq.s32.totalorder %s29, 0
      %p76 = por %p74, %p75
      %p77 = scmp.ne.s32.totalorder %s63, %s64
      %p78 = scmp.eq.s32.totalorder %s30, 1
      %p79 = por %p77, %p78
      %p81 = scmp.ne.s32.totalorder %s64, %s80
      %p82 = scmp.eq.s32.totalorder %s30, 0
      %p83 = por %p81, %p82
      %s85 = sadd.s32 %s84, 1
      %p88 = scmp.eq.s32.totalorder %s24, 1
      %p89 = scmp.ne.s32.totalorder %s84, %s86
      %p90 = scmp.eq.s32.totalorder %s24, 0
      %p91 = por %p89, %p90
      %p92 = scmp.ne.s32.totalorder %s84, %s86
      %p93 = scmp.eq.s32.totalorder %s29, 1
      %p94 = por %p92, %p93
      %p95 = scmp.ne.s32.totalorder %s86, %s87
      %p96 = scmp.eq.s32.totalorder %s29, 0
      %p97 = por %p95, %p96
      %p98 = scmp.ne.s32.totalorder %s86, %s87
      %p99 = scmp.eq.s32.totalorder %s30, 1
      %p100 = por %p98, %p99
      %p102 = scmp.ne.s32.totalorder %s87, %s101
      %p103 = scmp.eq.s32.totalorder %s30, 0
      %p104 = por %p102, %p103
      %s106 = sadd.s32 %s105, 1
      %p109 = scmp.eq.s32.totalorder %s24, 1
      %p110 = scmp.ne.s32.totalorder %s105, %s107
      %p111 = scmp.eq.s32.totalorder %s24, 0
      %p112 = por %p110, %p111
      %p113 = scmp.ne.s32.totalorder %s105, %s107
      %p114 = scmp.eq.s32.totalorder %s29, 1
      %p115 = por %p113, %p114
      %p116 = scmp.ne.s32.totalorder %s107, %s108
      %p117 = scmp.eq.s32.totalorder %s29, 0
      %p118 = por %p116, %p117
      %p119 = scmp.ne.s32.totalorder %s107, %s108
      %p120 = scmp.eq.s32.totalorder %s30, 1
      %p121 = por %p119, %p120
      %p123 = scmp.ne.s32.totalorder %s108, %s122
      %p124 = scmp.eq.s32.totalorder %s30, 0
      %p125 = por %p123, %p124
      %s127 = sadd.s32 %s126, 1
      %p130 = scmp.eq.s32.totalorder %s24, 1
      %p131 = scmp.ne.s32.totalorder %s126, %s128
      %p132 = scmp.eq.s32.totalorder %s24, 0
      %p133 = por %p131, %p132
      %p134 = scmp.ne.s32.totalorder %s126, %s128
      %p135 = scmp.eq.s32.totalorder %s29, 1
      %p136 = por %p134, %p135
      %p137 = scmp.ne.s32.totalorder %s128, %s129
      %p138 = scmp.eq.s32.totalorder %s29, 0
      %p139 = por %p137, %p138
      %p140 = scmp.ne.s32.totalorder %s128, %s129
      %p141 = scmp.eq.s32.totalorder %s30, 1
      %p142 = por %p140, %p141
      %p144 = scmp.ne.s32.totalorder %s129, %s143
      %p145 = scmp.eq.s32.totalorder %s30, 0
      %p146 = por %p144, %p145
      %s148 = sadd.s32 %s147, 1
      %p151 = scmp.eq.s32.totalorder %s24, 1
      %p152 = scmp.ne.s32.totalorder %s147, %s149
      %p153 = scmp.eq.s32.totalorder %s24, 0
      %p154 = por %p152, %p153
      %p155 = scmp.ne.s32.totalorder %s147, %s149
      %p156 = scmp.eq.s32.totalorder %s29, 1
      %p157 = por %p155, %p156
      %p158 = scmp.ne.s32.totalorder %s149, %s150
      %p159 = scmp.eq.s32.totalorder %s29, 0
      %p160 = por %p158, %p159
      %p161 = scmp.ne.s32.totalorder %s149, %s150
      %p162 = scmp.eq.s32.totalorder %s30, 1
      %p163 = por %p161, %p162
      %p165 = scmp.ne.s32.totalorder %s150, %s164
      %p166 = scmp.eq.s32.totalorder %s30, 0
      %p167 = por %p165, %p166
      %s169 = sadd.s32 %s168, 1
      %p172 = scmp.eq.s32.totalorder %s24, 1
      %p173 = scmp.ne.s32.totalorder %s168, %s170
      %p174 = scmp.eq.s32.totalorder %s24, 0
      %p175 = por %p173, %p174
      %p176 = scmp.ne.s32.totalorder %s168, %s170
      %p177 = scmp.eq.s32.totalorder %s29, 1
      %p178 = por %p176, %p177
      %p179 = scmp.ne.s32.totalorder %s170, %s171
      %p180 = scmp.eq.s32.totalorder %s29, 0
      %p181 = por %p179, %p180
      %p182 = scmp.ne.s32.totalorder %s170, %s171
      %p183 = scmp.eq.s32.totalorder %s30, 1
      %p184 = por %p182, %p183
      %p186 = scmp.ne.s32.totalorder %s171, %s185
      %p187 = scmp.eq.s32.totalorder %s30, 0
      %p188 = por %p186, %p187
      %s190 = sadd.s32 %s189, 1
      %p193 = scmp.eq.s32.totalorder %s24, 1
      %p194 = scmp.ne.s32.totalorder %s189, %s191
      %p195 = scmp.eq.s32.totalorder %s24, 0
      %p196 = por %p194, %p195
      %p197 = scmp.ne.s32.totalorder %s189, %s191
      %p198 = scmp.eq.s32.totalorder %s29, 1
      %p199 = por %p197, %p198
      %p200 = scmp.ne.s32.totalorder %s191, %s192
      %p201 = scmp.eq.s32.totalorder %s29, 0
      %p202 = por %p200, %p201
      %p203 = scmp.ne.s32.totalorder %s191, %s192
      %p204 = scmp.eq.s32.totalorder %s30, 1
      %p205 = por %p203, %p204
      %p207 = scmp.ne.s32.totalorder %s192, %s206
      %p208 = scmp.eq.s32.totalorder %s30, 0
      %p209 = por %p207, %p208
      %s211 = sadd.s32 %s210, 1
      %p214 = scmp.eq.s32.totalorder %s24, 1
      %p215 = scmp.ne.s32.totalorder %s210, %s212
      %p216 = scmp.eq.s32.totalorder %s24, 0
      %p217 = por %p215, %p216
      %p218 = scmp.ne.s32.totalorder %s210, %s212
      %p219 = scmp.eq.s32.totalorder %s29, 1
      %p220 = por %p218, %p219
      %p221 = scmp.ne.s32.totalorder %s212, %s213
      %p222 = scmp.eq.s32.totalorder %s29, 0
      %p223 = por %p221, %p222
      %p224 = scmp.ne.s32.totalorder %s212, %s213
      %p225 = scmp.eq.s32.totalorder %s30, 1
      %p226 = por %p224, %p225
      %p228 = scmp.ne.s32.totalorder %s213, %s227
      %p229 = scmp.eq.s32.totalorder %s30, 0
      %p230 = por %p228, %p229
      %s232 = sadd.s32 %s231, 1
      %p235 = scmp.eq.s32.totalorder %s24, 1
      %p236 = scmp.ne.s32.totalorder %s231, %s233
      %p237 = scmp.eq.s32.totalorder %s24, 0
      %p238 = por %p236, %p237
      %p239 = scmp.ne.s32.totalorder %s231, %s233
      %p240 = scmp.eq.s32.totalorder %s29, 1
      %p241 = por %p239, %p240
      %p242 = scmp.ne.s32.totalorder %s233, %s234
      %p243 = scmp.eq.s32.totalorder %s29, 0
      %p244 = por %p242, %p243
      %p245 = scmp.ne.s32.totalorder %s233, %s234
      %p246 = scmp.eq.s32.totalorder %s30, 1
      %p247 = por %p245, %p246
      %p249 = scmp.ne.s32.totalorder %s234, %s248
      %p250 = scmp.eq.s32.totalorder %s30, 0
      %p251 = por %p249, %p250
      %s253 = sadd.s32 %s252, 1
      %p256 = scmp.eq.s32.totalorder %s24, 1
      %p257 = scmp.ne.s32.totalorder %s252, %s254
      %p258 = scmp.eq.s32.totalorder %s24, 0
      %p259 = por %p257, %p258
      %p260 = scmp.ne.s32.totalorder %s252, %s254
      %p261 = scmp.eq.s32.totalorder %s29, 1
      %p262 = por %p260, %p261
      %p263 = scmp.ne.s32.totalorder %s254, %s255
      %p264 = scmp.eq.s32.totalorder %s29, 0
      %p265 = por %p263, %p264
      %p266 = scmp.ne.s32.totalorder %s254, %s255
      %p267 = scmp.eq.s32.totalorder %s30, 1
      %p268 = por %p266, %p267
      %p270 = scmp.ne.s32.totalorder %s255, %s269
      %p271 = scmp.eq.s32.totalorder %s30, 0
      %p272 = por %p270, %p271
      %s274 = sadd.s32 %s273, 1
      %p277 = scmp.eq.s32.totalorder %s24, 1
      %p278 = scmp.ne.s32.totalorder %s273, %s275
      %p279 = scmp.eq.s32.totalorder %s24, 0
      %p280 = por %p278, %p279
      %p281 = scmp.ne.s32.totalorder %s273, %s275
      %p282 = scmp.eq.s32.totalorder %s29, 1
      %p283 = por %p281, %p282
      %p284 = scmp.ne.s32.totalorder %s275, %s276
      %p285 = scmp.eq.s32.totalorder %s29, 0
      %p286 = por %p284, %p285
      %p287 = scmp.ne.s32.totalorder %s275, %s276
      %p288 = scmp.eq.s32.totalorder %s30, 1
      %p289 = por %p287, %p288
      %p291 = scmp.ne.s32.totalorder %s276, %s290
      %p292 = scmp.eq.s32.totalorder %s30, 0
      %p293 = por %p291, %p292
      %s294 = ssub.s32 %s24, %s31
      %p295 = scmp.eq.s32.totalorder %s294, 0
      %s297 = sadd.s32 %s296, 1
      %s298 = scalar_select %p295, %s296, %s297
      %p301 = pneg %p295
      %p302 = scmp.eq.s32.totalorder %s24, 1
      %p303 = por %p301, %p302
      %p304 = scmp.ne.s32.totalorder %s296, %s299
      %p305 = scmp.eq.s32.totalorder %s24, 0
      %p306 = por %p304, %p305
      %p307 = scmp.ne.s32.totalorder %s296, %s299
      %p308 = scmp.eq.s32.totalorder %s29, 1
      %p309 = por %p307, %p308
      %p310 = scmp.ne.s32.totalorder %s299, %s300
      %p311 = scmp.eq.s32.totalorder %s29, 0
      %p312 = por %p310, %p311
      %p313 = scmp.ne.s32.totalorder %s299, %s300
      %p314 = scmp.eq.s32.totalorder %s30, 1
      %p315 = por %p313, %p314
      %p317 = scmp.ne.s32.totalorder %s300, %s316
      %p318 = scmp.eq.s32.totalorder %s30, 0
      %p319 = por %p317, %p318
      %p320 = scmp.le.s32.totalorder 1, %s24
      %p321 = scmp.lt.s32.totalorder %s24, 3
      %p322 = pnand %p320, %p321
      %p323 = pneg %p322
      // Predicated region
      $region9: #{tpu_custom_call.1} parent=5 // pred_check
        _
      $region10: #{tpu_custom_call.1} parent=5 // pred_check_branch
        %325 = sbr.rel (%p322) target = $region12
      $region11: #{tpu_custom_call.1} parent=5 // pred_region
        %s326 = ssub.s32 %s24, 1
        // Predicated region
        $region13: #{tpu_custom_call.1} parent=11 // pred_check
          %p327 = pneg %p97
        $region14: #{tpu_custom_call.1} parent=11 // pred_check_branch
          %329 = sbr.rel (%p327) target = $region16
        $region15: #{tpu_custom_call.1} parent=11 // pred_region
          _
        $region16: #{tpu_custom_call.1} parent=11 // pred_fallthru
          _
        // Predicated region
        $region17: #{tpu_custom_call.1} parent=11 // pred_check
          %p330 = pneg %p118
        $region18: #{tpu_custom_call.1} parent=11 // pred_check_branch
          %332 = sbr.rel (%p330) target = $region20
        $region19: #{tpu_custom_call.1} parent=11 // pred_region
          _
        $region20: #{tpu_custom_call.1} parent=11 // pred_fallthru
          _
        // Predicated region
        $region21: #{tpu_custom_call.1} parent=11 // pred_check
          %p333 = pneg %p139
        $region22: #{tpu_custom_call.1} parent=11 // pred_check_branch
          %335 = sbr.rel (%p333) target = $region24
        $region23: #{tpu_custom_call.1} parent=11 // pred_region
          _
        $region24: #{tpu_custom_call.1} parent=11 // pred_fallthru
          _
        // Predicated region
        $region25: #{tpu_custom_call.1} parent=11 // pred_check
          %p336 = pneg %p160
        $region26: #{tpu_custom_call.1} parent=11 // pred_check_branch
          %338 = sbr.rel (%p336) target = $region28
        $region27: #{tpu_custom_call.1} parent=11 // pred_region
          _
        $region28: #{tpu_custom_call.1} parent=11 // pred_fallthru
          _
        // Predicated region
        $region29: #{tpu_custom_call.1} parent=11 // pred_check
          %p339 = pneg %p181
        $region30: #{tpu_custom_call.1} parent=11 // pred_check_branch
          %341 = sbr.rel (%p339) target = $region32
        $region31: #{tpu_custom_call.1} parent=11 // pred_region
          _
        $region32: #{tpu_custom_call.1} parent=11 // pred_fallthru
          _
        // Predicated region
        $region33: #{tpu_custom_call.1} parent=11 // pred_check
          %p342 = pneg %p202
        $region34: #{tpu_custom_call.1} parent=11 // pred_check_branch
          %344 = sbr.rel (%p342) target = $region36
        $region35: #{tpu_custom_call.1} parent=11 // pred_region
          _
        $region36: #{tpu_custom_call.1} parent=11 // pred_fallthru
          _
        // Predicated region
        $region37: #{tpu_custom_call.1} parent=11 // pred_check
          %p345 = pneg %p223
        $region38: #{tpu_custom_call.1} parent=11 // pred_check_branch
          %347 = sbr.rel (%p345) target = $region40
        $region39: #{tpu_custom_call.1} parent=11 // pred_region
          _
        $region40: #{tpu_custom_call.1} parent=11 // pred_fallthru
          _
        // Predicated region
        $region41: #{tpu_custom_call.1} parent=11 // pred_check
          %p348 = pneg %p244
        $region42: #{tpu_custom_call.1} parent=11 // pred_check_branch
          %350 = sbr.rel (%p348) target = $region44
        $region43: #{tpu_custom_call.1} parent=11 // pred_region
          _
        $region44: #{tpu_custom_call.1} parent=11 // pred_fallthru
          _
        // Predicated region
        $region45: #{tpu_custom_call.1} parent=11 // pred_check
          %p351 = pneg %p265
        $region46: #{tpu_custom_call.1} parent=11 // pred_check_branch
          %353 = sbr.rel (%p351) target = $region48
        $region47: #{tpu_custom_call.1} parent=11 // pred_region
          _
        $region48: #{tpu_custom_call.1} parent=11 // pred_fallthru
          _
        // Predicated region
        $region49: #{tpu_custom_call.1} parent=11 // pred_check
          %p354 = pneg %p286
        $region50: #{tpu_custom_call.1} parent=11 // pred_check_branch
          %356 = sbr.rel (%p354) target = $region52
        $region51: #{tpu_custom_call.1} parent=11 // pred_region
          _
        $region52: #{tpu_custom_call.1} parent=11 // pred_fallthru
          _
      $region12: #{tpu_custom_call.1} parent=5 // pred_fallthru
        _
      %p357 = scmp.lt.s32.totalorder %s24, 2
      // Predicated region
      $region53: #{tpu_custom_call.1} parent=5 // pred_check
        %p358 = pneg %p357
      $region54: #{tpu_custom_call.1} parent=5 // pred_check_branch
        %360 = sbr.rel (%p358) target = $region56
      $region55: #{tpu_custom_call.1} parent=5 // pred_region
        // Predicated region
        $region57: #{tpu_custom_call.1} parent=55 // pred_check
          %p361 = pneg %p44
        $region58: #{tpu_custom_call.1} parent=55 // pred_check_branch
          %363 = sbr.rel (%p361) target = $region60
        $region59: #{tpu_custom_call.1} parent=55 // pred_region
          %s364 = sand.u32 %s34, 1
          %s365 = scalar_lea.sflag [#allocation3], %s364
          %s366 = sand.u32 %s34, 1
          %s367 = smul.addr %s366, 8
          %s368 = scalar_lea.vmem [#allocation2], %s367
          %s370 = ssub.s32 128, 128
          %371 = vsyncadd %s365, %s370
          %s372 = smul.addr %s24, 128
          %s373 = scalar_lea.hbm %s0, %s372
          %s375 = sshll.u32 %s368, 4
          %s376 = int_to_ptr.vmem [resolvable:$true] %s375
          %378 = dma.hbm_to_vmem [thread:$0]  %s373, 128, %s376, %s365
        $region60: #{tpu_custom_call.1} parent=55 // pred_fallthru
          _
        // Predicated region
        $region61: #{tpu_custom_call.1} parent=55 // pred_check
          %p379 = pneg %p70
        $region62: #{tpu_custom_call.1} parent=55 // pred_check_branch
          %381 = sbr.rel (%p379) target = $region64
        $region63: #{tpu_custom_call.1} parent=55 // pred_region
          %s382 = smul.u32 8, %s24
          %p383 = scmp.lt.s32.totalorder %s382, 15
          %s384 = scalar_select %p383, %s382, 15
          %s385 = smul.addr %s384, 8
          %s386 = scalar_lea.vmem %s1, %s385
          %s387 = smul.u32 8, %s24
        $region64: #{tpu_custom_call.1} parent=55 // pred_fallthru
          _
      $region56: #{tpu_custom_call.1} parent=5 // pred_fallthru
        _
      %p388 = scmp.le.s32.totalorder 1, %s24
      %p389 = scmp.lt.s32.totalorder %s24, 3
      %p390 = pnand %p388, %p389
      %p391 = pneg %p390
      // Predicated region
      $region65: #{tpu_custom_call.1} parent=5 // pred_check
        _
      $region66: #{tpu_custom_call.1} parent=5 // pred_check_branch
        %393 = sbr.rel (%p390) target = $region68
      $region67: #{tpu_custom_call.1} parent=5 // pred_region
        %s394 = ssub.s32 %s24, 1
        %s395 = sand.u32 %s37, 1
        %s396 = scalar_lea.sflag [#allocation3], %s395
        %s397 = sand.u32 %s37, 1
        %s398 = smul.addr %s397, 8
        %s399 = scalar_lea.vmem [#allocation2], %s398
        // Predicated region
        $region69: #{tpu_custom_call.1} parent=67 // pred_check
          %p400 = pneg %p50
        $region70: #{tpu_custom_call.1} parent=67 // pred_check_branch
          %402 = sbr.rel (%p400) target = $region72
        $region71: #{tpu_custom_call.1} parent=67 // pred_region
          %403 = dma.done %s396, 128
        $region72: #{tpu_custom_call.1} parent=67 // pred_fallthru
          _
        %s404 = sand.u32 %s37, 1
        %s405 = scalar_lea.sflag [#allocation3], %s404
        %s406 = sand.u32 %s37, 1
        %s407 = smul.addr %s406, 8
        %s408 = scalar_lea.vmem [#allocation2], %s407
        %p409 = pneg %p50
        %p410 = pneg %p47
        %s411 = smul.u32 8, %s29
        %p412 = scmp.lt.s32.totalorder %s411, 15
        %s413 = scalar_select %p412, %s411, 15
        %s414 = smul.addr %s413, 8
        %s415 = scalar_lea.vmem %s1, %s414
        %p416 = pneg %p76
        %p417 = pneg %p73
        %p418 = pneg %p97
        %p419 = pneg %p94
        %p420 = pneg %p118
        %p421 = pneg %p115
        %p422 = pneg %p139
        %p423 = pneg %p136
        %p424 = pneg %p160
        %p425 = pneg %p157
        %p426 = pneg %p181
        %p427 = pneg %p178
        %p428 = pneg %p202
        %p429 = pneg %p199
        %p430 = pneg %p223
        %p431 = pneg %p220
        %p432 = pneg %p244
        %p433 = pneg %p241
        %p434 = pneg %p265
        %p435 = pneg %p262
        %p436 = pneg %p286
        %p437 = pneg %p283
        %p438 = pneg %p312
        %p439 = pneg %p309
        %s440 = sand.u32 %s299, 1
        %s441 = scalar_lea.sflag [#allocation4], %s440
        %s442 = sand.u32 %s299, 1
        %s443 = smul.addr %s442, 8
        %s444 = scalar_lea.vmem [#allocation5], %s443
        %s445 = smul.u32 8, %s29
        %p446 = scmp.lt.s32.totalorder %s445, 15
        %s447 = scalar_select %p446, %s445, 15
        %s448 = smul.addr %s447, 8
        %s449 = scalar_lea.vmem %s1, %s448
        %s450 = smul.u32 8, %s29
        %v451 = vld [vmem:[%s399] sm:$0xff]
        %v452 = vld [vmem:[%s449] sm:$0xff]
        %v453 = vld [vmem:[%s449 + $0x8] sm:$0xff]
        %v454 = vld [vmem:[%s449 + $0x10] sm:$0xff]
        %v455 = vld [vmem:[%s449 + $0x18] sm:$0xff]
        %v456 = vld [vmem:[%s449 + $0x20] sm:$0xff]
        %v457 = vld [vmem:[%s449 + $0x28] sm:$0xff]
        %v458 = vld [vmem:[%s449 + $0x30] sm:$0xff]
        %v459 = vld [vmem:[%s449 + $0x38] sm:$0xff]
        %v460 = vld [vmem:[%s2] sm:$0xff]
        %v461 = vld [vmem:[%s2 + $0x8] sm:$0xff]
        %v462 = vld [vmem:[%s2 + $0x10] sm:$0xff]
        %v463 = vld [vmem:[%s2 + $0x18] sm:$0xff]
        %v464 = vld [vmem:[%s3] sm:$0x1]
        %v466 = vlaneseq
        %v467 = vshrl.u32 %v466, 7
        %v468 = vsub.s32 0, %v467
        %v469 = vrot.slane %v464, %v468
        %vm471 = vcmask 261120
        %v473 = vsel %vm471, %v451, 0
        %475 = vmatprep.subr.mxu0 0.0
        %476 = vmatpush1.msra.mxu0 %v460
        %477 = vmatprep.subr.mxu0 0.0
        %478 = vmatpush1.msra.mxu0 %v461
        %479 = vmatprep.subr.mxu0 0.0
        %480 = vmatpush1.msra.mxu0 %v462
        %481 = vmatprep.subr.mxu0 0.0
        %482 = vmatpush1.msra.mxu0 %v463
        %483 = vmatprep.subr.mxu0 0.0
        %484 = vmatpush1.msra.mxu0 0.0
        %485 = vmatprep.subr.mxu0 0.0
        %486 = vmatpush1.msra.mxu0 0.0
        %487 = vmatprep.subr.mxu0 0.0
        %488 = vmatpush1.msra.mxu0 0.0
        %489 = vmatprep.subr.mxu0 0.0
        %490 = vmatpush1.msra.mxu0 0.0
        %491 = vmatprep.subr.mxu0 0.0
        %492 = vmatpush1.msra.mxu0 0.0
        %493 = vmatprep.subr.mxu0 0.0
        %494 = vmatpush1.msra.mxu0 0.0
        %495 = vmatprep.subr.mxu0 0.0
        %496 = vmatpush1.msra.mxu0 0.0
        %497 = vmatprep.subr.mxu0 0.0
        %498 = vmatpush1.msra.mxu0 0.0
        %499 = vmatprep.subr.mxu0 0.0
        %500 = vmatpush1.msra.mxu0 0.0
        %501 = vmatprep.subr.mxu0 0.0
        %502 = vmatpush1.msra.mxu0 0.0
        %503 = vmatprep.subr.mxu0 0.0
        %504 = vmatpush1.msra.mxu0 0.0
        %505 = vmatprep.subr.mxu0 0.0
        %506 = vmatpush1.msra.mxu0 0.0
        %507 = vmatprep.subr.mxu0 0.0
        %508 = vmatpush1.msra.mxu0 0.0
        %509 = vmatprep.subr.mxu0 0.0
        %510 = vmatpush1.msra.mxu0 0.0
        %511 = vmatprep.subr.mxu0 0.0
        %512 = vmatpush1.msra.mxu0 0.0
        %513 = vmatprep.subr.mxu0 0.0
        %514 = vmatpush1.msra.mxu0 0.0
        %515 = vmatprep.subr.mxu0 0.0
        %516 = vmatpush1.msra.mxu0 0.0
        %517 = vmatprep.subr.mxu0 0.0
        %518 = vmatpush1.msra.mxu0 0.0
        %519 = vmatprep.subr.mxu0 0.0
        %520 = vmatpush1.msra.mxu0 0.0
        %521 = vmatprep.subr.mxu0 0.0
        %522 = vmatpush1.msra.mxu0 0.0
        %523 = vmatprep.subr.mxu0 0.0
        %524 = vmatpush1.msra.mxu0 0.0
        %525 = vmatprep.subr.mxu0 0.0
        %526 = vmatpush1.msra.mxu0 0.0
        %527 = vmatprep.subr.mxu0 0.0
        %528 = vmatpush1.msra.mxu0 0.0
        %529 = vmatprep.subr.mxu0 0.0
        %530 = vmatpush1.msra.mxu0 0.0
        %531 = vmatprep.subr.mxu0 0.0
        %532 = vmatpush1.msra.mxu0 0.0
        %533 = vmatprep.subr.mxu0 0.0
        %534 = vmatpush1.msra.mxu0 0.0
        %535 = vmatprep.subr.mxu0 0.0
        %536 = vmatpush1.msra.mxu0 0.0
        %537 = vmatprep.subr.mxu0 0.0
        %538 = vmatpush1.msra.mxu0 0.0
        %539 = vmatprep.mubr.f32.mxu0 0.0
        %540 = vmatmul.mubr.f32.gmra.mrb[0].mxu0 %v473
        %v541 = vpop.f32.mrb[0].mxu0
        %v542 = vadd.f32 %v469, %v541
        %v543 = vpop.f32.mrb[0].mxu0
        %544 = vdwg.mxu0
        %v545 = vmax.f32 %v542, 0.0
        %v546 = vld [vmem:[%s4] sm:$0xff]
        %v547 = vld [vmem:[%s4 + $0x8] sm:$0xff]
        %v548 = vld [vmem:[%s4 + $0x10] sm:$0xff]
        %v549 = vld [vmem:[%s4 + $0x18] sm:$0xff]
        %v550 = vld [vmem:[%s5] sm:$0x1]
        %v552 = vlaneseq
        %v553 = vshrl.u32 %v552, 7
        %v554 = vsub.s32 0, %v553
        %v555 = vrot.slane %v550, %v554
        %v558 = vsel %vm471, %v545, 0
        %560 = vmatprep.subr.mxu0 0.0
        %561 = vmatpush1.msra.mxu0 %v546
        %562 = vmatprep.subr.mxu0 0.0
        %563 = vmatpush1.msra.mxu0 %v547
        %564 = vmatprep.subr.mxu0 0.0
        %565 = vmatpush1.msra.mxu0 %v548
        %566 = vmatprep.subr.mxu0 0.0
        %567 = vmatpush1.msra.mxu0 %v549
        %568 = vmatprep.subr.mxu0 0.0
        %569 = vmatpush1.msra.mxu0 0.0
        %570 = vmatprep.subr.mxu0 0.0
        %571 = vmatpush1.msra.mxu0 0.0
        %572 = vmatprep.subr.mxu0 0.0
        %573 = vmatpush1.msra.mxu0 0.0
        %574 = vmatprep.subr.mxu0 0.0
        %575 = vmatpush1.msra.mxu0 0.0
        %576 = vmatprep.subr.mxu0 0.0
        %577 = vmatpush1.msra.mxu0 0.0
        %578 = vmatprep.subr.mxu0 0.0
        %579 = vmatpush1.msra.mxu0 0.0
        %580 = vmatprep.subr.mxu0 0.0
        %581 = vmatpush1.msra.mxu0 0.0
        %582 = vmatprep.subr.mxu0 0.0
        %583 = vmatpush1.msra.mxu0 0.0
        %584 = vmatprep.subr.mxu0 0.0
        %585 = vmatpush1.msra.mxu0 0.0
        %586 = vmatprep.subr.mxu0 0.0
        %587 = vmatpush1.msra.mxu0 0.0
        %588 = vmatprep.subr.mxu0 0.0
        %589 = vmatpush1.msra.mxu0 0.0
        %590 = vmatprep.subr.mxu0 0.0
        %591 = vmatpush1.msra.mxu0 0.0
        %592 = vmatprep.subr.mxu0 0.0
        %593 = vmatpush1.msra.mxu0 0.0
        %594 = vmatprep.subr.mxu0 0.0
        %595 = vmatpush1.msra.mxu0 0.0
        %596 = vmatprep.subr.mxu0 0.0
        %597 = vmatpush1.msra.mxu0 0.0
        %598 = vmatprep.subr.mxu0 0.0
        %599 = vmatpush1.msra.mxu0 0.0
        %600 = vmatprep.subr.mxu0 0.0
        %601 = vmatpush1.msra.mxu0 0.0
        %602 = vmatprep.subr.mxu0 0.0
        %603 = vmatpush1.msra.mxu0 0.0
        %604 = vmatprep.subr.mxu0 0.0
        %605 = vmatpush1.msra.mxu0 0.0
        %606 = vmatprep.subr.mxu0 0.0
        %607 = vmatpush1.msra.mxu0 0.0
        %608 = vmatprep.subr.mxu0 0.0
        %609 = vmatpush1.msra.mxu0 0.0
        %610 = vmatprep.subr.mxu0 0.0
        %611 = vmatpush1.msra.mxu0 0.0
        %612 = vmatprep.subr.mxu0 0.0
        %613 = vmatpush1.msra.mxu0 0.0
        %614 = vmatprep.subr.mxu0 0.0
        %615 = vmatpush1.msra.mxu0 0.0
        %616 = vmatprep.subr.mxu0 0.0
        %617 = vmatpush1.msra.mxu0 0.0
        %618 = vmatprep.subr.mxu0 0.0
        %619 = vmatpush1.msra.mxu0 0.0
        %620 = vmatprep.subr.mxu0 0.0
        %621 = vmatpush1.msra.mxu0 0.0
        %622 = vmatprep.subr.mxu0 0.0
        %623 = vmatpush1.msra.mxu0 0.0
        %624 = vmatprep.mubr.f32.mxu0 0.0
        %625 = vmatmul.mubr.f32.gmra.mrb[0].mxu0 %v558
        %v626 = vpop.f32.mrb[0].mxu0
        %v627 = vadd.f32 %v555, %v626
        %v628 = vpop.f32.mrb[0].mxu0
        %629 = vdwg.mxu0
        %v630 = vld [vmem:[%s6] sm:$0xff]
        %v631 = vld [vmem:[%s6 + $0x8] sm:$0xff]
        %v632 = vld [vmem:[%s6 + $0x10] sm:$0xff]
        %v633 = vld [vmem:[%s6 + $0x18] sm:$0xff]
        %v634 = vld [vmem:[%s7] sm:$0x1]
        %v636 = vlaneseq
        %v637 = vshrl.u32 %v636, 7
        %v638 = vsub.s32 0, %v637
        %v639 = vrot.slane %v634, %v638
        %v642 = vsel %vm471, %v452, 0
        %v645 = vsel %vm471, %v453, 0
        %v648 = vsel %vm471, %v454, 0
        %v651 = vsel %vm471, %v455, 0
        %v654 = vsel %vm471, %v456, 0
        %v657 = vsel %vm471, %v457, 0
        %v660 = vsel %vm471, %v458, 0
        %v663 = vsel %vm471, %v459, 0
        %665 = vmatprep.subr.mxu0 0.0
        %666 = vmatpush1.msra.mxu0 %v630
        %667 = vmatprep.subr.mxu0 0.0
        %668 = vmatpush1.msra.mxu0 %v631
        %669 = vmatprep.subr.mxu0 0.0
        %670 = vmatpush1.msra.mxu0 %v632
        %671 = vmatprep.subr.mxu0 0.0
        %672 = vmatpush1.msra.mxu0 %v633
        %673 = vmatprep.subr.mxu0 0.0
        %674 = vmatpush1.msra.mxu0 0.0
        %675 = vmatprep.subr.mxu0 0.0
        %676 = vmatpush1.msra.mxu0 0.0
        %677 = vmatprep.subr.mxu0 0.0
        %678 = vmatpush1.msra.mxu0 0.0
        %679 = vmatprep.subr.mxu0 0.0
        %680 = vmatpush1.msra.mxu0 0.0
        %681 = vmatprep.subr.mxu0 0.0
        %682 = vmatpush1.msra.mxu0 0.0
        %683 = vmatprep.subr.mxu0 0.0
        %684 = vmatpush1.msra.mxu0 0.0
        %685 = vmatprep.subr.mxu0 0.0
        %686 = vmatpush1.msra.mxu0 0.0
        %687 = vmatprep.subr.mxu0 0.0
        %688 = vmatpush1.msra.mxu0 0.0
        %689 = vmatprep.subr.mxu0 0.0
        %690 = vmatpush1.msra.mxu0 0.0
        %691 = vmatprep.subr.mxu0 0.0
        %692 = vmatpush1.msra.mxu0 0.0
        %693 = vmatprep.subr.mxu0 0.0
        %694 = vmatpush1.msra.mxu0 0.0
        %695 = vmatprep.subr.mxu0 0.0
        %696 = vmatpush1.msra.mxu0 0.0
        %697 = vmatprep.subr.mxu0 0.0
        %698 = vmatpush1.msra.mxu0 0.0
        %699 = vmatprep.subr.mxu0 0.0
        %700 = vmatpush1.msra.mxu0 0.0
        %701 = vmatprep.subr.mxu0 0.0
        %702 = vmatpush1.msra.mxu0 0.0
        %703 = vmatprep.subr.mxu0 0.0
        %704 = vmatpush1.msra.mxu0 0.0
        %705 = vmatprep.subr.mxu0 0.0
        %706 = vmatpush1.msra.mxu0 0.0
        %707 = vmatprep.subr.mxu0 0.0
        %708 = vmatpush1.msra.mxu0 0.0
        %709 = vmatprep.subr.mxu0 0.0
        %710 = vmatpush1.msra.mxu0 0.0
        %711 = vmatprep.subr.mxu0 0.0
        %712 = vmatpush1.msra.mxu0 0.0
        %713 = vmatprep.subr.mxu0 0.0
        %714 = vmatpush1.msra.mxu0 0.0
        %715 = vmatprep.subr.mxu0 0.0
        %716 = vmatpush1.msra.mxu0 0.0
        %717 = vmatprep.subr.mxu0 0.0
        %718 = vmatpush1.msra.mxu0 0.0
        %719 = vmatprep.subr.mxu0 0.0
        %720 = vmatpush1.msra.mxu0 0.0
        %721 = vmatprep.subr.mxu0 0.0
        %722 = vmatpush1.msra.mxu0 0.0
        %723 = vmatprep.subr.mxu0 0.0
        %724 = vmatpush1.msra.mxu0 0.0
        %725 = vmatprep.subr.mxu0 0.0
        %726 = vmatpush1.msra.mxu0 0.0
        %727 = vmatprep.subr.mxu0 0.0
        %728 = vmatpush1.msra.mxu0 0.0
        %729 = vmatprep.mubr.f32.mxu0 0.0
        %730 = vmatmul.mubr.f32.gmra.mrb[0].mxu0 %v642
        %v731 = vpop.f32.mrb[0].mxu0
        %v732 = vadd.f32 %v639, %v731
        %v733 = vpop.f32.mrb[0].mxu0
        %734 = vmatprep.mubr.f32.mxu0 0.0
        %735 = vmatmul.mubr.f32.gmra.mrb[0].mxu0 %v645
        %v736 = vpop.f32.mrb[0].mxu0
        %v737 = vadd.f32 %v639, %v736
        %v738 = vpop.f32.mrb[0].mxu0
        %739 = vmatprep.mubr.f32.mxu0 0.0
        %740 = vmatmul.mubr.f32.gmra.mrb[0].mxu0 %v648
        %v741 = vpop.f32.mrb[0].mxu0
        %v742 = vadd.f32 %v639, %v741
        %v743 = vpop.f32.mrb[0].mxu0
        %744 = vmatprep.mubr.f32.mxu0 0.0
        %745 = vmatmul.mubr.f32.gmra.mrb[0].mxu0 %v651
        %v746 = vpop.f32.mrb[0].mxu0
        %v747 = vadd.f32 %v639, %v746
        %v748 = vpop.f32.mrb[0].mxu0
        %749 = vmatprep.mubr.f32.mxu0 0.0
        %750 = vmatmul.mubr.f32.gmra.mrb[0].mxu0 %v654
        %v751 = vpop.f32.mrb[0].mxu0
        %v752 = vadd.f32 %v639, %v751
        %v753 = vpop.f32.mrb[0].mxu0
        %754 = vmatprep.mubr.f32.mxu0 0.0
        %755 = vmatmul.mubr.f32.gmra.mrb[0].mxu0 %v657
        %v756 = vpop.f32.mrb[0].mxu0
        %v757 = vadd.f32 %v639, %v756
        %v758 = vpop.f32.mrb[0].mxu0
        %759 = vmatprep.mubr.f32.mxu0 0.0
        %760 = vmatmul.mubr.f32.gmra.mrb[0].mxu0 %v660
        %v761 = vpop.f32.mrb[0].mxu0
        %v762 = vadd.f32 %v639, %v761
        %v763 = vpop.f32.mrb[0].mxu0
        %764 = vmatprep.mubr.f32.mxu0 0.0
        %765 = vmatmul.mubr.f32.gmra.mrb[0].mxu0 %v663
        %v766 = vpop.f32.mrb[0].mxu0
        %v767 = vadd.f32 %v639, %v766
        %v768 = vpop.f32.mrb[0].mxu0
        %769 = vdwg.mxu0
        %v770 = vmax.f32 %v732, 0.0
        %v771 = vmax.f32 %v737, 0.0
        %v772 = vmax.f32 %v742, 0.0
        %v773 = vmax.f32 %v747, 0.0
        %v774 = vmax.f32 %v752, 0.0
        %v775 = vmax.f32 %v757, 0.0
        %v776 = vmax.f32 %v762, 0.0
        %v777 = vmax.f32 %v767, 0.0
        %v778 = vld [vmem:[%s8] sm:$0xff]
        %v779 = vld [vmem:[%s8 + $0x8] sm:$0xff]
        %v780 = vld [vmem:[%s8 + $0x10] sm:$0xff]
        %v781 = vld [vmem:[%s8 + $0x18] sm:$0xff]
        %v782 = vld [vmem:[%s9] sm:$0x1]
        %v784 = vlaneseq
        %v785 = vshrl.u32 %v784, 7
        %v786 = vsub.s32 0, %v785
        %v787 = vrot.slane %v782, %v786
        %v790 = vsel %vm471, %v770, 0
        %v793 = vsel %vm471, %v771, 0
        %v796 = vsel %vm471, %v772, 0
        %v799 = vsel %vm471, %v773, 0
        %v802 = vsel %vm471, %v774, 0
        %v805 = vsel %vm471, %v775, 0
        %v808 = vsel %vm471, %v776, 0
        %v811 = vsel %vm471, %v777, 0
        %813 = vmatprep.subr.mxu0 0.0
        %814 = vmatpush1.msra.mxu0 %v778
        %815 = vmatprep.subr.mxu0 0.0
        %816 = vmatpush1.msra.mxu0 %v779
        %817 = vmatprep.subr.mxu0 0.0
        %818 = vmatpush1.msra.mxu0 %v780
        %819 = vmatprep.subr.mxu0 0.0
        %820 = vmatpush1.msra.mxu0 %v781
        %821 = vmatprep.subr.mxu0 0.0
        %822 = vmatpush1.msra.mxu0 0.0
        %823 = vmatprep.subr.mxu0 0.0
        %824 = vmatpush1.msra.mxu0 0.0
        %825 = vmatprep.subr.mxu0 0.0
        %826 = vmatpush1.msra.mxu0 0.0
        %827 = vmatprep.subr.mxu0 0.0
        %828 = vmatpush1.msra.mxu0 0.0
        %829 = vmatprep.subr.mxu0 0.0
        %830 = vmatpush1.msra.mxu0 0.0
        %831 = vmatprep.subr.mxu0 0.0
        %832 = vmatpush1.msra.mxu0 0.0
        %833 = vmatprep.subr.mxu0 0.0
        %834 = vmatpush1.msra.mxu0 0.0
        %835 = vmatprep.subr.mxu0 0.0
        %836 = vmatpush1.msra.mxu0 0.0
        %837 = vmatprep.subr.mxu0 0.0
        %838 = vmatpush1.msra.mxu0 0.0
        %839 = vmatprep.subr.mxu0 0.0
        %840 = vmatpush1.msra.mxu0 0.0
        %841 = vmatprep.subr.mxu0 0.0
        %842 = vmatpush1.msra.mxu0 0.0
        %843 = vmatprep.subr.mxu0 0.0
        %844 = vmatpush1.msra.mxu0 0.0
        %845 = vmatprep.subr.mxu0 0.0
        %846 = vmatpush1.msra.mxu0 0.0
        %847 = vmatprep.subr.mxu0 0.0
        %848 = vmatpush1.msra.mxu0 0.0
        %849 = vmatprep.subr.mxu0 0.0
        %850 = vmatpush1.msra.mxu0 0.0
        %851 = vmatprep.subr.mxu0 0.0
        %852 = vmatpush1.msra.mxu0 0.0
        %853 = vmatprep.subr.mxu0 0.0
        %854 = vmatpush1.msra.mxu0 0.0
        %855 = vmatprep.subr.mxu0 0.0
        %856 = vmatpush1.msra.mxu0 0.0
        %857 = vmatprep.subr.mxu0 0.0
        %858 = vmatpush1.msra.mxu0 0.0
        %859 = vmatprep.subr.mxu0 0.0
        %860 = vmatpush1.msra.mxu0 0.0
        %861 = vmatprep.subr.mxu0 0.0
        %862 = vmatpush1.msra.mxu0 0.0
        %863 = vmatprep.subr.mxu0 0.0
        %864 = vmatpush1.msra.mxu0 0.0
        %865 = vmatprep.subr.mxu0 0.0
        %866 = vmatpush1.msra.mxu0 0.0
        %867 = vmatprep.subr.mxu0 0.0
        %868 = vmatpush1.msra.mxu0 0.0
        %869 = vmatprep.subr.mxu0 0.0
        %870 = vmatpush1.msra.mxu0 0.0
        %871 = vmatprep.subr.mxu0 0.0
        %872 = vmatpush1.msra.mxu0 0.0
        %873 = vmatprep.subr.mxu0 0.0
        %874 = vmatpush1.msra.mxu0 0.0
        %875 = vmatprep.subr.mxu0 0.0
        %876 = vmatpush1.msra.mxu0 0.0
        %877 = vmatprep.mubr.f32.mxu0 0.0
        %878 = vmatmul.mubr.f32.gmra.mrb[0].mxu0 %v790
        %v879 = vpop.f32.mrb[0].mxu0
        %v880 = vadd.f32 %v787, %v879
        %v881 = vpop.f32.mrb[0].mxu0
        %882 = vmatprep.mubr.f32.mxu0 0.0
        %883 = vmatmul.mubr.f32.gmra.mrb[0].mxu0 %v793
        %v884 = vpop.f32.mrb[0].mxu0
        %v885 = vadd.f32 %v787, %v884
        %v886 = vpop.f32.mrb[0].mxu0
        %887 = vmatprep.mubr.f32.mxu0 0.0
        %888 = vmatmul.mubr.f32.gmra.mrb[0].mxu0 %v796
        %v889 = vpop.f32.mrb[0].mxu0
        %v890 = vadd.f32 %v787, %v889
        %v891 = vpop.f32.mrb[0].mxu0
        %892 = vmatprep.mubr.f32.mxu0 0.0
        %893 = vmatmul.mubr.f32.gmra.mrb[0].mxu0 %v799
        %v894 = vpop.f32.mrb[0].mxu0
        %v895 = vadd.f32 %v787, %v894
        %v896 = vpop.f32.mrb[0].mxu0
        %897 = vmatprep.mubr.f32.mxu0 0.0
        %898 = vmatmul.mubr.f32.gmra.mrb[0].mxu0 %v802
        %v899 = vpop.f32.mrb[0].mxu0
        %v900 = vadd.f32 %v787, %v899
        %v901 = vpop.f32.mrb[0].mxu0
        %902 = vmatprep.mubr.f32.mxu0 0.0
        %903 = vmatmul.mubr.f32.gmra.mrb[0].mxu0 %v805
        %v904 = vpop.f32.mrb[0].mxu0
        %v905 = vadd.f32 %v787, %v904
        %v906 = vpop.f32.mrb[0].mxu0
        %907 = vmatprep.mubr.f32.mxu0 0.0
        %908 = vmatmul.mubr.f32.gmra.mrb[0].mxu0 %v808
        %v909 = vpop.f32.mrb[0].mxu0
        %v910 = vadd.f32 %v787, %v909
        %v911 = vpop.f32.mrb[0].mxu0
        %912 = vmatprep.mubr.f32.mxu0 0.0
        %913 = vmatmul.mubr.f32.gmra.mrb[0].mxu0 %v811
        %v914 = vpop.f32.mrb[0].mxu0
        %v915 = vadd.f32 %v787, %v914
        %v916 = vpop.f32.mrb[0].mxu0
        %917 = vdwg.mxu0
        %v919 = vcombine.high %v627, %v627
        %v921 = vunpack.c.l.s4 1966171168
        %v922 = vunpack.c.0.s8 %v921
        %v923 = vlaneseq
        %v924 = vshrl.u32 %v923, 7
        %v925 = vsub.s32 %v922, %v924
        %v926 = vrot.slane %v627, %v925
        %v928 = vunpack.c.l.s4 1966171168
        %v929 = vunpack.c.0.s8 %v928
        %v930 = vlaneseq
        %v931 = vshrl.u32 %v930, 7
        %v932 = vsub.s32 %v929, %v931
        %v933 = vrot.slane %v919, %v932
        %v934 = vcombine.high %v926, %v926
        %v935 = vcombine.high %v933, %v933
        %v937 = vunpack.c.l.s4 1966171168
        %v938 = vunpack.c.0.s8 %v937
        %v939 = vlaneseq
        %v940 = vshrl.u32 %v939, 7
        %v941 = vsub.s32 %v938, %v940
        %v942 = vrot.slane %v926, %v941
        %v944 = vunpack.c.l.s4 1966171168
        %v945 = vunpack.c.0.s8 %v944
        %v946 = vlaneseq
        %v947 = vshrl.u32 %v946, 7
        %v948 = vsub.s32 %v945, %v947
        %v949 = vrot.slane %v933, %v948
        %v951 = vunpack.c.l.s4 1966171168
        %v952 = vunpack.c.0.s8 %v951
        %v953 = vlaneseq
        %v954 = vshrl.u32 %v953, 7
        %v955 = vsub.s32 %v952, %v954
        %v956 = vrot.slane %v934, %v955
        %v958 = vunpack.c.l.s4 1966171168
        %v959 = vunpack.c.0.s8 %v958
        %v960 = vlaneseq
        %v961 = vshrl.u32 %v960, 7
        %v962 = vsub.s32 %v959, %v961
        %v963 = vrot.slane %v935, %v962
        %v964 = vcombine.high %v942, %v942
        %v965 = vcombine.high %v949, %v949
        %v966 = vcombine.high %v956, %v956
        %v967 = vcombine.high %v963, %v963
        %v968 = vlaneseq
        %v969 = vshrl.u32 %v968, 7
        %v970 = vsub.s32 0, %v969
        %v971 = vrot.slane %v942, %v970
        %v972 = vlaneseq
        %v973 = vshrl.u32 %v972, 7
        %v974 = vsub.s32 0, %v973
        %v975 = vrot.slane %v956, %v974
        %v976 = vlaneseq
        %v977 = vshrl.u32 %v976, 7
        %v978 = vsub.s32 0, %v977
        %v979 = vrot.slane %v964, %v978
        %v980 = vlaneseq
        %v981 = vshrl.u32 %v980, 7
        %v982 = vsub.s32 0, %v981
        %v983 = vrot.slane %v966, %v982
        %v984 = vlaneseq
        %v985 = vshrl.u32 %v984, 7
        %v986 = vsub.s32 0, %v985
        %v987 = vrot.slane %v949, %v986
        %v988 = vlaneseq
        %v989 = vshrl.u32 %v988, 7
        %v990 = vsub.s32 0, %v989
        %v991 = vrot.slane %v963, %v990
        %v992 = vlaneseq
        %v993 = vshrl.u32 %v992, 7
        %v994 = vsub.s32 0, %v993
        %v995 = vrot.slane %v965, %v994
        %v996 = vlaneseq
        %v997 = vshrl.u32 %v996, 7
        %v998 = vsub.s32 0, %v997
        %v999 = vrot.slane %v967, %v998
        %v1008 = vmul.f32 %v880, %v971
        %v1009 = vmul.f32 %v885, %v975
        %v1010 = vmul.f32 %v890, %v979
        %v1011 = vmul.f32 %v895, %v983
        %v1012 = vmul.f32 %v900, %v987
        %v1013 = vmul.f32 %v905, %v991
        %v1014 = vmul.f32 %v910, %v995
        %v1015 = vmul.f32 %v915, %v999
        %v1016 = vsel %vm471, %v1008, 0.0
        %1017 = vadd.xlane.f32.xlu0 %v1016
        %v1018 = vpop.xlane.xlu0 %1017
        %v1019 = vsel %vm471, %v1009, 0.0
        %1020 = vadd.xlane.f32.xlu0 %v1019
        %v1021 = vpop.xlane.xlu0 %1020
        %v1022 = vsel %vm471, %v1010, 0.0
        %1023 = vadd.xlane.f32.xlu0 %v1022
        %v1024 = vpop.xlane.xlu0 %1023
        %v1025 = vsel %vm471, %v1011, 0.0
        %1026 = vadd.xlane.f32.xlu0 %v1025
        %v1027 = vpop.xlane.xlu0 %1026
        %v1028 = vsel %vm471, %v1012, 0.0
        %1029 = vadd.xlane.f32.xlu0 %v1028
        %v1030 = vpop.xlane.xlu0 %1029
        %v1031 = vsel %vm471, %v1013, 0.0
        %1032 = vadd.xlane.f32.xlu0 %v1031
        %v1033 = vpop.xlane.xlu0 %1032
        %v1034 = vsel %vm471, %v1014, 0.0
        %1035 = vadd.xlane.f32.xlu0 %v1034
        %v1036 = vpop.xlane.xlu0 %1035
        %v1037 = vsel %vm471, %v1015, 0.0
        %1038 = vadd.xlane.f32.xlu0 %v1037
        %v1039 = vpop.xlane.xlu0 %1038
        %v1040 = vmul.f32 %v1018, 0.17677669
        %v1041 = vmul.f32 %v1021, 0.17677669
        %v1042 = vmul.f32 %v1024, 0.17677669
        %v1043 = vmul.f32 %v1027, 0.17677669
        %v1044 = vmul.f32 %v1030, 0.17677669
        %v1045 = vmul.f32 %v1033, 0.17677669
        %v1046 = vmul.f32 %v1036, 0.17677669
        %v1047 = vmul.f32 %v1039, 0.17677669
        %v1056 = vlaneseq
        %v1057 = vand.u32 %v1056, 127
        %v1058 = vlaneseq
        %v1059 = vshrl.u32 %v1058, 7
        %v1060 = vsub.s32 %v1057, %v1059
        %v1061 = vrot.slane %v1040, %v1060
        %v1062 = vlaneseq
        %v1063 = vshrl.u32 %v1062, 7
        %v1064 = vsub.s32 %v1057, %v1063
        %v1065 = vrot.slane %v1041, %v1064
        %v1066 = vlaneseq
        %v1067 = vshrl.u32 %v1066, 7
        %v1068 = vsub.s32 %v1057, %v1067
        %v1069 = vrot.slane %v1042, %v1068
        %v1070 = vlaneseq
        %v1071 = vshrl.u32 %v1070, 7
        %v1072 = vsub.s32 %v1057, %v1071
        %v1073 = vrot.slane %v1043, %v1072
        %v1074 = vlaneseq
        %v1075 = vshrl.u32 %v1074, 7
        %v1076 = vsub.s32 %v1057, %v1075
        %v1077 = vrot.slane %v1044, %v1076
        %v1078 = vlaneseq
        %v1079 = vshrl.u32 %v1078, 7
        %v1080 = vsub.s32 %v1057, %v1079
        %v1081 = vrot.slane %v1045, %v1080
        %v1082 = vlaneseq
        %v1083 = vshrl.u32 %v1082, 7
        %v1084 = vsub.s32 %v1057, %v1083
        %v1085 = vrot.slane %v1046, %v1084
        %v1086 = vlaneseq
        %v1087 = vshrl.u32 %v1086, 7
        %v1088 = vsub.s32 %v1057, %v1087
        %v1089 = vrot.slane %v1047, %v1088
        %vm1090 = vcmask 1041409
        %v1091 = vsel %vm1090, %v1065, %v1061
        %vm1092 = vcmask 1042434
        %v1093 = vsel %vm1092, %v1069, %v1091
        %vm1094 = vcmask 1043459
        %v1095 = vsel %vm1094, %v1073, %v1093
        %vm1096 = vcmask 1044484
        %v1097 = vsel %vm1096, %v1077, %v1095
        %vm1098 = vcmask 1045509
        %v1099 = vsel %vm1098, %v1081, %v1097
        %vm1100 = vcmask 1046534
        %v1101 = vsel %vm1100, %v1085, %v1099
        %vm1102 = vcmask 1047559
        %v1103 = vsel %vm1102, %v1089, %v1101
        %vm1105 = vcmask 64512
        %v1106 = vsel %vm1105, %v1103, -inf
        %1107 = vmax.xlane.f32.xlu0 %v1106
        %v1108 = vpop.xlane.xlu0 %1107
        %v1110 = vlaneseq
        %v1111 = vshrl.u32 %v1110, 7
        %v1112 = vsub.s32 0, %v1111
        %v1113 = vrot.slane %v1108, %v1112
        %v1114 = vlaneseq
        %v1115 = vshrl.u32 %v1114, 7
        %v1116 = vsub.s32 1, %v1115
        %v1117 = vrot.slane %v1108, %v1116
        %v1118 = vlaneseq
        %v1119 = vshrl.u32 %v1118, 7
        %v1120 = vsub.s32 2, %v1119
        %v1121 = vrot.slane %v1108, %v1120
        %v1122 = vlaneseq
        %v1123 = vshrl.u32 %v1122, 7
        %v1124 = vsub.s32 3, %v1123
        %v1125 = vrot.slane %v1108, %v1124
        %v1126 = vlaneseq
        %v1127 = vshrl.u32 %v1126, 7
        %v1128 = vsub.s32 4, %v1127
        %v1129 = vrot.slane %v1108, %v1128
        %v1130 = vlaneseq
        %v1131 = vshrl.u32 %v1130, 7
        %v1132 = vsub.s32 5, %v1131
        %v1133 = vrot.slane %v1108, %v1132
        %v1134 = vlaneseq
        %v1135 = vshrl.u32 %v1134, 7
        %v1136 = vsub.s32 6, %v1135
        %v1137 = vrot.slane %v1108, %v1136
        %v1138 = vlaneseq
        %v1139 = vshrl.u32 %v1138, 7
        %v1140 = vsub.s32 7, %v1139
        %v1141 = vrot.slane %v1108, %v1140
        %v1150 = vsub.f32 %v1040, %v1113
        %v1151 = vsub.f32 %v1041, %v1117
        %v1152 = vsub.f32 %v1042, %v1121
        %v1153 = vsub.f32 %v1043, %v1125
        %v1154 = vsub.f32 %v1044, %v1129
        %v1155 = vsub.f32 %v1045, %v1133
        %v1156 = vsub.f32 %v1046, %v1137
        %v1157 = vsub.f32 %v1047, %v1141
        %v1158 = vmul.f32 %v1150, 1.442695
        %v1159 = vpow.pop %v1158
        %v1160 = vmul.f32 %v1151, 1.442695
        %v1161 = vpow.pop %v1160
        %v1162 = vmul.f32 %v1152, 1.442695
        %v1163 = vpow.pop %v1162
        %v1164 = vmul.f32 %v1153, 1.442695
        %v1165 = vpow.pop %v1164
        %v1166 = vmul.f32 %v1154, 1.442695
        %v1167 = vpow.pop %v1166
        %v1168 = vmul.f32 %v1155, 1.442695
        %v1169 = vpow.pop %v1168
        %v1170 = vmul.f32 %v1156, 1.442695
        %v1171 = vpow.pop %v1170
        %v1172 = vmul.f32 %v1157, 1.442695
        %v1173 = vpow.pop %v1172
        %1182 = vset.pattern.permute.xlu0 0
        %1183 = vperm.xlu0 %1182, %v1159
        %v1184 = vpop.permute.xlu0 %1183
        %1185 = vset.pattern.permute.xlu0 0
        %1186 = vperm.xlu0 %1185, %v1161
        %v1187 = vpop.permute.xlu0 %1186
        %1188 = vset.pattern.permute.xlu0 0
        %1189 = vperm.xlu0 %1188, %v1163
        %v1190 = vpop.permute.xlu0 %1189
        %1191 = vset.pattern.permute.xlu0 0
        %1192 = vperm.xlu0 %1191, %v1165
        %v1193 = vpop.permute.xlu0 %1192
        %1194 = vset.pattern.permute.xlu0 0
        %1195 = vperm.xlu0 %1194, %v1167
        %v1196 = vpop.permute.xlu0 %1195
        %1197 = vset.pattern.permute.xlu0 0
        %1198 = vperm.xlu0 %1197, %v1169
        %v1199 = vpop.permute.xlu0 %1198
        %1200 = vset.pattern.permute.xlu0 0
        %1201 = vperm.xlu0 %1200, %v1171
        %v1202 = vpop.permute.xlu0 %1201
        %1203 = vset.pattern.permute.xlu0 0
        %1204 = vperm.xlu0 %1203, %v1173
        %v1205 = vpop.permute.xlu0 %1204
        %v1206 = vlaneseq
        %v1207 = vshrl.u32 %v1206, 7
        %v1208 = vsub.s32 %v1057, %v1207
        %v1209 = vrot.slane %v1184, %v1208
        %v1210 = vlaneseq
        %v1211 = vshrl.u32 %v1210, 7
        %v1212 = vsub.s32 %v1057, %v1211
        %v1213 = vrot.slane %v1187, %v1212
        %v1214 = vlaneseq
        %v1215 = vshrl.u32 %v1214, 7
        %v1216 = vsub.s32 %v1057, %v1215
        %v1217 = vrot.slane %v1190, %v1216
        %v1218 = vlaneseq
        %v1219 = vshrl.u32 %v1218, 7
        %v1220 = vsub.s32 %v1057, %v1219
        %v1221 = vrot.slane %v1193, %v1220
        %v1222 = vlaneseq
        %v1223 = vshrl.u32 %v1222, 7
        %v1224 = vsub.s32 %v1057, %v1223
        %v1225 = vrot.slane %v1196, %v1224
        %v1226 = vlaneseq
        %v1227 = vshrl.u32 %v1226, 7
        %v1228 = vsub.s32 %v1057, %v1227
        %v1229 = vrot.slane %v1199, %v1228
        %v1230 = vlaneseq
        %v1231 = vshrl.u32 %v1230, 7
        %v1232 = vsub.s32 %v1057, %v1231
        %v1233 = vrot.slane %v1202, %v1232
        %v1234 = vlaneseq
        %v1235 = vshrl.u32 %v1234, 7
        %v1236 = vsub.s32 %v1057, %v1235
        %v1237 = vrot.slane %v1205, %v1236
        %v1238 = vsel %vm1090, %v1213, %v1209
        %v1239 = vsel %vm1092, %v1217, %v1238
        %v1240 = vsel %vm1094, %v1221, %v1239
        %v1241 = vsel %vm1096, %v1225, %v1240
        %v1242 = vsel %vm1098, %v1229, %v1241
        %v1243 = vsel %vm1100, %v1233, %v1242
        %v1244 = vsel %vm1102, %v1237, %v1243
        %v1246 = vsel %vm1105, %v1244, 0.0
        %1247 = vadd.xlane.f32.xlu0 %v1246
        %v1248 = vpop.xlane.xlu0 %1247
        %v1250 = vlaneseq
        %v1251 = vshrl.u32 %v1250, 7
        %v1252 = vsub.s32 0, %v1251
        %v1253 = vrot.slane %v1248, %v1252
        %v1254 = vlaneseq
        %v1255 = vshrl.u32 %v1254, 7
        %v1256 = vsub.s32 1, %v1255
        %v1257 = vrot.slane %v1248, %v1256
        %v1258 = vlaneseq
        %v1259 = vshrl.u32 %v1258, 7
        %v1260 = vsub.s32 2, %v1259
        %v1261 = vrot.slane %v1248, %v1260
        %v1262 = vlaneseq
        %v1263 = vshrl.u32 %v1262, 7
        %v1264 = vsub.s32 3, %v1263
        %v1265 = vrot.slane %v1248, %v1264
        %v1266 = vlaneseq
        %v1267 = vshrl.u32 %v1266, 7
        %v1268 = vsub.s32 4, %v1267
        %v1269 = vrot.slane %v1248, %v1268
        %v1270 = vlaneseq
        %v1271 = vshrl.u32 %v1270, 7
        %v1272 = vsub.s32 5, %v1271
        %v1273 = vrot.slane %v1248, %v1272
        %v1274 = vlaneseq
        %v1275 = vshrl.u32 %v1274, 7
        %v1276 = vsub.s32 6, %v1275
        %v1277 = vrot.slane %v1248, %v1276
        %v1278 = vlaneseq
        %v1279 = vshrl.u32 %v1278, 7
        %v1280 = vsub.s32 7, %v1279
        %v1281 = vrot.slane %v1248, %v1280
        %v1290 = vrcp.pop %v1253
        %v1291 = vmul.f32 %v1159, %v1290
        %v1292 = vrcp.pop %v1257
        %v1293 = vmul.f32 %v1161, %v1292
        %v1294 = vrcp.pop %v1261
        %v1295 = vmul.f32 %v1163, %v1294
        %v1296 = vrcp.pop %v1265
        %v1297 = vmul.f32 %v1165, %v1296
        %v1298 = vrcp.pop %v1269
        %v1299 = vmul.f32 %v1167, %v1298
        %v1300 = vrcp.pop %v1273
        %v1301 = vmul.f32 %v1169, %v1300
        %v1302 = vrcp.pop %v1277
        %v1303 = vmul.f32 %v1171, %v1302
        %v1304 = vrcp.pop %v1281
        %v1305 = vmul.f32 %v1173, %v1304
        %1307 = vset.pattern.permute.xlu0 0
        %1308 = vperm.xlu0 %1307, %v1291
        %v1309 = vpop.permute.xlu0 %1308
        %1312 = vset.pattern.permute.xlu0 0
        %1313 = vperm.xlu0 %1312, %v1293
        %v1314 = vpop.permute.xlu0 %1313
        %1317 = vset.pattern.permute.xlu0 0
        %1318 = vperm.xlu0 %1317, %v1295
        %v1319 = vpop.permute.xlu0 %1318
        %1322 = vset.pattern.permute.xlu0 0
        %1323 = vperm.xlu0 %1322, %v1297
        %v1324 = vpop.permute.xlu0 %1323
        %1327 = vset.pattern.permute.xlu0 0
        %1328 = vperm.xlu0 %1327, %v1299
        %v1329 = vpop.permute.xlu0 %1328
        %1332 = vset.pattern.permute.xlu0 0
        %1333 = vperm.xlu0 %1332, %v1301
        %v1334 = vpop.permute.xlu0 %1333
        %1337 = vset.pattern.permute.xlu0 0
        %1338 = vperm.xlu0 %1337, %v1303
        %v1339 = vpop.permute.xlu0 %1338
        %1342 = vset.pattern.permute.xlu0 0
        %1343 = vperm.xlu0 %1342, %v1305
        %v1344 = vpop.permute.xlu0 %1343
        %v1346 = vmul.f32 %v1309, %v880
        %v1347 = vmul.f32 %v1314, %v885
        %v1348 = vmul.f32 %v1319, %v890
        %v1349 = vmul.f32 %v1324, %v895
        %v1350 = vmul.f32 %v1329, %v900
        %v1351 = vmul.f32 %v1334, %v905
        %v1352 = vmul.f32 %v1339, %v910
        %v1353 = vmul.f32 %v1344, %v915
        %v1354 = vsel %vm471, %v1346, 0.0
        %v1355 = vrot.slane %v1354, 4
        %v1356 = vadd.f32 %v1354, %v1355
        %v1357 = vrot.slane %v1356, 2
        %v1358 = vadd.f32 %v1356, %v1357
        %v1359 = vrot.slane %v1358, 1
        %v1360 = vadd.f32 %v1358, %v1359
        %v1361 = vsel %vm471, %v1347, 0.0
        %v1362 = vrot.slane %v1361, 4
        %v1363 = vadd.f32 %v1361, %v1362
        %v1364 = vrot.slane %v1363, 2
        %v1365 = vadd.f32 %v1363, %v1364
        %v1366 = vrot.slane %v1365, 1
        %v1367 = vadd.f32 %v1365, %v1366
        %v1368 = vsel %vm471, %v1348, 0.0
        %v1369 = vrot.slane %v1368, 4
        %v1370 = vadd.f32 %v1368, %v1369
        %v1371 = vrot.slane %v1370, 2
        %v1372 = vadd.f32 %v1370, %v1371
        %v1373 = vrot.slane %v1372, 1
        %v1374 = vadd.f32 %v1372, %v1373
        %v1375 = vsel %vm471, %v1349, 0.0
        %v1376 = vrot.slane %v1375, 4
        %v1377 = vadd.f32 %v1375, %v1376
        %v1378 = vrot.slane %v1377, 2
        %v1379 = vadd.f32 %v1377, %v1378
        %v1380 = vrot.slane %v1379, 1
        %v1381 = vadd.f32 %v1379, %v1380
        %v1382 = vsel %vm471, %v1350, 0.0
        %v1383 = vrot.slane %v1382, 4
        %v1384 = vadd.f32 %v1382, %v1383
        %v1385 = vrot.slane %v1384, 2
        %v1386 = vadd.f32 %v1384, %v1385
        %v1387 = vrot.slane %v1386, 1
        %v1388 = vadd.f32 %v1386, %v1387
        %v1389 = vsel %vm471, %v1351, 0.0
        %v1390 = vrot.slane %v1389, 4
        %v1391 = vadd.f32 %v1389, %v1390
        %v1392 = vrot.slane %v1391, 2
        %v1393 = vadd.f32 %v1391, %v1392
        %v1394 = vrot.slane %v1393, 1
        %v1395 = vadd.f32 %v1393, %v1394
        %v1396 = vsel %vm471, %v1352, 0.0
        %v1397 = vrot.slane %v1396, 4
        %v1398 = vadd.f32 %v1396, %v1397
        %v1399 = vrot.slane %v1398, 2
        %v1400 = vadd.f32 %v1398, %v1399
        %v1401 = vrot.slane %v1400, 1
        %v1402 = vadd.f32 %v1400, %v1401
        %v1403 = vsel %vm471, %v1353, 0.0
        %v1404 = vrot.slane %v1403, 4
        %v1405 = vadd.f32 %v1403, %v1404
        %v1406 = vrot.slane %v1405, 2
        %v1407 = vadd.f32 %v1405, %v1406
        %v1408 = vrot.slane %v1407, 1
        %v1409 = vadd.f32 %v1407, %v1408
        %v1410 = vld [vmem:[%s10] sm:$0xff]
        %v1411 = vld [vmem:[%s10 + $0x8] sm:$0xff]
        %v1412 = vld [vmem:[%s10 + $0x10] sm:$0xff]
        %v1413 = vld [vmem:[%s10 + $0x18] sm:$0xff]
        %v1414 = vld [vmem:[%s11] sm:$0x1]
        %v1416 = vlaneseq
        %v1417 = vshrl.u32 %v1416, 7
        %v1418 = vsub.s32 0, %v1417
        %v1419 = vrot.slane %v1414, %v1418
        %v1429 = vsel %vm1090, %v1367, %v1360
        %v1430 = vsel %vm1092, %v1374, %v1429
        %v1431 = vsel %vm1094, %v1381, %v1430
        %v1432 = vsel %vm1096, %v1388, %v1431
        %v1433 = vsel %vm1098, %v1395, %v1432
        %v1434 = vsel %vm1100, %v1402, %v1433
        %v1435 = vsel %vm1102, %v1409, %v1434
        %v1436 = vsel %vm471, %v1435, 0
        %1438 = vmatprep.subr.mxu0 0.0
        %1439 = vmatpush1.msra.mxu0 %v1410
        %1440 = vmatprep.subr.mxu0 0.0
        %1441 = vmatpush1.msra.mxu0 %v1411
        %1442 = vmatprep.subr.mxu0 0.0
        %1443 = vmatpush1.msra.mxu0 %v1412
        %1444 = vmatprep.subr.mxu0 0.0
        %1445 = vmatpush1.msra.mxu0 %v1413
        %1446 = vmatprep.subr.mxu0 0.0
        %1447 = vmatpush1.msra.mxu0 0.0
        %1448 = vmatprep.subr.mxu0 0.0
        %1449 = vmatpush1.msra.mxu0 0.0
        %1450 = vmatprep.subr.mxu0 0.0
        %1451 = vmatpush1.msra.mxu0 0.0
        %1452 = vmatprep.subr.mxu0 0.0
        %1453 = vmatpush1.msra.mxu0 0.0
        %1454 = vmatprep.subr.mxu0 0.0
        %1455 = vmatpush1.msra.mxu0 0.0
        %1456 = vmatprep.subr.mxu0 0.0
        %1457 = vmatpush1.msra.mxu0 0.0
        %1458 = vmatprep.subr.mxu0 0.0
        %1459 = vmatpush1.msra.mxu0 0.0
        %1460 = vmatprep.subr.mxu0 0.0
        %1461 = vmatpush1.msra.mxu0 0.0
        %1462 = vmatprep.subr.mxu0 0.0
        %1463 = vmatpush1.msra.mxu0 0.0
        %1464 = vmatprep.subr.mxu0 0.0
        %1465 = vmatpush1.msra.mxu0 0.0
        %1466 = vmatprep.subr.mxu0 0.0
        %1467 = vmatpush1.msra.mxu0 0.0
        %1468 = vmatprep.subr.mxu0 0.0
        %1469 = vmatpush1.msra.mxu0 0.0
        %1470 = vmatprep.subr.mxu0 0.0
        %1471 = vmatpush1.msra.mxu0 0.0
        %1472 = vmatprep.subr.mxu0 0.0
        %1473 = vmatpush1.msra.mxu0 0.0
        %1474 = vmatprep.subr.mxu0 0.0
        %1475 = vmatpush1.msra.mxu0 0.0
        %1476 = vmatprep.subr.mxu0 0.0
        %1477 = vmatpush1.msra.mxu0 0.0
        %1478 = vmatprep.subr.mxu0 0.0
        %1479 = vmatpush1.msra.mxu0 0.0
        %1480 = vmatprep.subr.mxu0 0.0
        %1481 = vmatpush1.msra.mxu0 0.0
        %1482 = vmatprep.subr.mxu0 0.0
        %1483 = vmatpush1.msra.mxu0 0.0
        %1484 = vmatprep.subr.mxu0 0.0
        %1485 = vmatpush1.msra.mxu0 0.0
        %1486 = vmatprep.subr.mxu0 0.0
        %1487 = vmatpush1.msra.mxu0 0.0
        %1488 = vmatprep.subr.mxu0 0.0
        %1489 = vmatpush1.msra.mxu0 0.0
        %1490 = vmatprep.subr.mxu0 0.0
        %1491 = vmatpush1.msra.mxu0 0.0
        %1492 = vmatprep.subr.mxu0 0.0
        %1493 = vmatpush1.msra.mxu0 0.0
        %1494 = vmatprep.subr.mxu0 0.0
        %1495 = vmatpush1.msra.mxu0 0.0
        %1496 = vmatprep.subr.mxu0 0.0
        %1497 = vmatpush1.msra.mxu0 0.0
        %1498 = vmatprep.subr.mxu0 0.0
        %1499 = vmatpush1.msra.mxu0 0.0
        %1500 = vmatprep.subr.mxu0 0.0
        %1501 = vmatpush1.msra.mxu0 0.0
        %1502 = vmatprep.mubr.f32.mxu0 0.0
        %1503 = vmatmul.mubr.f32.gmra.mrb[0].mxu0 %v1436
        %v1504 = vpop.f32.mrb[0].mxu0
        %v1505 = vadd.f32 %v1419, %v1504
        %v1506 = vpop.f32.mrb[0].mxu0
        %1507 = vdwg.mxu0
        %1508 = vst [vmem:[%s444] sm:$0xff] %v1505
        %s1509 = sand.u32 %s299, 1
        %s1510 = scalar_lea.sflag [#allocation4], %s1509
        %s1511 = sand.u32 %s299, 1
        %s1512 = smul.addr %s1511, 8
        %s1513 = scalar_lea.vmem [#allocation5], %s1512
        // Predicated region
        $region73: #{tpu_custom_call.1} parent=67 // pred_check
          %p1514 = pneg %p309
        $region74: #{tpu_custom_call.1} parent=67 // pred_check_branch
          %1516 = sbr.rel (%p1514) target = $region76
        $region75: #{tpu_custom_call.1} parent=67 // pred_region
          %s1518 = ssub.s32 128, 128
          %1519 = vsyncadd %s1510, %s1518
          %s1520 = smul.addr %s29, 128
          %s1521 = scalar_lea.hbm %s12, %s1520
          %s1523 = sshll.u32 %s1513, 4
          %s1524 = int_to_ptr.vmem [resolvable:$true] %s1523
          %1526 = dma.vmem_to_hbm [thread:$0]  %s1524, 128, %s1521, %s1510
        $region76: #{tpu_custom_call.1} parent=67 // pred_fallthru
          _
      $region68: #{tpu_custom_call.1} parent=5 // pred_fallthru
        _
      %p1527 = scmp.le.s32.totalorder 2, %s24
      // Predicated region
      $region77: #{tpu_custom_call.1} parent=5 // pred_check
        %p1528 = pneg %p1527
      $region78: #{tpu_custom_call.1} parent=5 // pred_check_branch
        %1530 = sbr.rel (%p1528) target = $region80
      $region79: #{tpu_custom_call.1} parent=5 // pred_region
        %s1531 = ssub.s32 %s24, 2
        // Predicated region
        $region81: #{tpu_custom_call.1} parent=79 // pred_check
          %p1532 = pneg %p315
        $region82: #{tpu_custom_call.1} parent=79 // pred_check_branch
          %1534 = sbr.rel (%p1532) target = $region84
        $region83: #{tpu_custom_call.1} parent=79 // pred_region
          %s1535 = sand.u32 %s300, 1
          %s1536 = scalar_lea.sflag [#allocation4], %s1535
          %s1537 = sand.u32 %s300, 1
          %s1538 = smul.addr %s1537, 8
          %s1539 = scalar_lea.vmem [#allocation5], %s1538
          %1540 = dma.done %s1536, 128
        $region84: #{tpu_custom_call.1} parent=79 // pred_fallthru
          _
      $region80: #{tpu_custom_call.1} parent=5 // pred_fallthru
        _
    $region6: #{tpu_custom_call.1} parent=1 // loop_footer
      %s28 = sadd.s32 1, %s24
    $region7: #{tpu_custom_call.1} parent=1 // loop_footer_branch
      %23 = sbr.rel target = $region3
    $region8: #{tpu_custom_call.1} parent=1 // loop_exit
      _
    %1541 = vsyncpa [#allocation3], 1
    %s1542 = scalar_lea.sflag [#allocation3], 1
    %1543 = vsyncpa %s1542, 1
    %1544 = vsyncpa [#allocation4], 1
    %s1545 = scalar_lea.sflag [#allocation4], 1
    %1546 = vsyncpa %s1545, 1

</llo_original>
